<compile_context>
chip_gen: v7x
topology: tpu7x:2x2x1
jax: 0.10.0
libtpu: 0.0.40
codegen_flags: <defaults>
</compile_context>

<pallas_src>
import functools

import jax
import jax.numpy as jnp
from jax.experimental import pallas as pl
from jax.experimental.pallas import tpu as pltpu


def get_padding(kernel_size, dilation=1):
    return (kernel_size * dilation - dilation) // 2


def _round_up(v, m):
    return ((v + m - 1) // m) * m


_VMEM_BUDGET = 32 * 1024 * 1024   # bytes; also passed as vmem_limit_bytes


# ---------------------------------------------------------------------------
# Fused kernel: pad+cast -> conv1(dil=d) -> lrelu -> conv2(dil=1) -> lrelu -> +x
# ---------------------------------------------------------------------------
def _resblock_stack_kernel(x_ref, xlo_ref, xhi_ref, w1_ref, b1_ref, w2_ref,
                           b2_ref, o_ref, xpad_ref, h_ref, *,
                           K, d1, p1, p2, t_tile, HP, slope):
    # x_ref  : (t_tile, C) f32     current tile (conv input + residual)
    # xlo_ref: (HP, C)     f32     HP rows just before the tile (halo source)
    # xhi_ref: (HP, C)     f32     HP rows just after the tile  (halo source)
    # w*_ref : (K, C, C)   bf16    b*_ref: (1, C) f32
    # o_ref  : (t_tile, C) f32
    # xpad_ref: (t_tile + 2*HP, C)  bf16 VMEM scratch (padded conv1 input)
    # h_ref   : (t_tile + 2*p2, C)  bf16 VMEM scratch (conv1 output + halo)
    tt = pl.program_id(1)
    nT = pl.num_programs(1)
    pt = p1 + p2
    C = w1_ref.shape[-1]
    M1 = t_tile + 2 * p2                      # intermediate rows needed

    # ---- fused zero-pad + bf16 cast of the conv-1 input window (in VMEM) ---
    # Layout: global row (t0 + i) lives at xpad row (HP + i); only rows
    # [HP - pt, HP + t_tile + pt) are ever read.  Interior store is aligned.
    xpad_ref[pl.ds(HP, t_tile), :] = x_ref[...].astype(xpad_ref.dtype)

    @pl.when(tt == 0)
    def _():                                  # sequence start: conv1 zero pad
        xpad_ref[pl.ds(HP - pt, pt), :] = jnp.zeros((pt, C), xpad_ref.dtype)

    @pl.when(tt > 0)
    def _():                                  # interior: halo from prev rows
        xpad_ref[pl.ds(HP - pt, pt), :] = (
            xlo_ref[pl.ds(HP - pt, pt), :].astype(xpad_ref.dtype))

    @pl.when(tt == nT - 1)
    def _():                                  # sequence end: conv1 zero pad
        xpad_ref[pl.ds(HP + t_tile, pt), :] = jnp.zeros((pt, C),
                                                        xpad_ref.dtype)

    @pl.when(tt < nT - 1)
    def _():                                  # interior: halo from next rows
        xpad_ref[pl.ds(HP + t_tile, pt), :] = (
            xhi_ref[pl.ds(0, pt), :].astype(xpad_ref.dtype))

    # ---- conv1 (dilation d1) + leaky_relu -> bf16 intermediate ------------
    acc1 = jnp.zeros((M1, C), jnp.float32)
    for k in range(K):                        # K tiny (3/5/7): static unroll
        acc1 = acc1 + jnp.dot(xpad_ref[pl.ds(HP - pt + k * d1, M1), :],
                              w1_ref[k], preferred_element_type=jnp.float32)
    acc1 = acc1 + b1_ref[...]                 # (1, C) broadcast
    acc1 = jnp.where(acc1 >= 0.0, acc1, slope * acc1)
    h_ref[...] = acc1.astype(h_ref.dtype)

    # conv2 zero-pads *its own* input: at sequence boundaries the intermediate
    # halo rows are zeros, NOT conv1 evaluated on padded x.
    @pl.when(tt == 0)
    def _():
        h_ref[pl.ds(0, p2), :] = jnp.zeros((p2, C), h_ref.dtype)

    @pl.when(tt == nT - 1)
    def _():
        h_ref[pl.ds(p2 + t_tile, p2), :] = jnp.zeros((p2, C), h_ref.dtype)

    # ---- conv2 (dilation 1) + leaky_relu + residual (f32) ------------------
    acc2 = jnp.zeros((t_tile, C), jnp.float32)
    for k in range(K):
        acc2 = acc2 + jnp.dot(h_ref[pl.ds(k, t_tile), :], w2_ref[k],
                              preferred_element_type=jnp.float32)
    acc2 = acc2 + b2_ref[...]
    acc2 = jnp.where(acc2 >= 0.0, acc2, slope * acc2)
    o_ref[...] = x_ref[...] + acc2            # residual added in full f32


def _pick_t_tile(T, C, K, HP, p2):
    """Largest T tile (multiple of HP, divisor of T) fitting the VMEM budget."""
    per_row = C * (2 * 4 + 2 * 4 + 2 + 2)     # db'd x + db'd out + 2 scratches
    fixed = (2 * 2 * K * C * C * 2 + 4 * HP * C * 4 + 4 * C * 4
             + 2 * HP * C * 2 + 2 * p2 * C * 2)
    budget = int(0.6 * _VMEM_BUDGET)          # headroom for double-buffering
    rows = max(HP, (budget - fixed) // per_row)
    t = min(T, max(HP, (rows // HP) * HP))
    while T % t != 0:
        t -= HP
    return t


def resblock_stack(x, w1, b1, w2, b2, *, dilation, slope, t_tile=None):
    """One ResBlockV1 stack. x: (B, T, C) f32 channels-last -> (B, T, C)."""
    B, T, C = x.shape
    K = w1.shape[0]
    assert K % 2 == 1, "odd kernel_size expected (HiFi-GAN uses 3/5/7)"
    p1 = get_padding(K, dilation)
    p2 = get_padding(K, 1)
    pt = p1 + p2                               # total conv-input halo rows
    HP = _round_up(max(pt, 8), 8)              # sublane-aligned halo block rows
    assert T % HP == 0, f"T={T} must be a multiple of {HP}"

    if t_tile is None:
        t_tile = _pick_t_tile(T, C, K, HP, p2)
    assert T % t_tile == 0 and t_tile % HP == 0, (T, t_tile, HP)
    nT = T // t_tile
    step = t_tile // HP                        # halo-block index stride
    n_hp = T // HP

    w1b = w1.astype(jnp.bfloat16)
    w2b = w2.astype(jnp.bfloat16)
    b1r = b1.reshape(1, C).astype(jnp.float32)
    b2r = b2.reshape(1, C).astype(jnp.float32)

    kernel = functools.partial(_resblock_stack_kernel, K=K, d1=dilation,
                               p1=p1, p2=p2, t_tile=t_tile, HP=HP, slope=slope)

    flops = 2 * B * K * C * C * (T + nT * 2 * p2 + T)
    bytes_accessed = (2 * B * T * C * 4                 # x read + y write
                      + 2 * B * nT * HP * C * 4         # halo re-reads
                      + 2 * K * C * C * 2 + 2 * C * 4)  # weights + biases

    grid_spec = pltpu.PrefetchScalarGridSpec(
        num_scalar_prefetch=0,
        grid=(B, nT),
        in_specs=[
            # current tile of x (f32): conv input + residual
            pl.BlockSpec((None, t_tile, C), lambda b, tt: (b, tt, 0)),
            # HP rows just before the tile (left halo source; clamped at edge)
            pl.BlockSpec((None, HP, C),
                         lambda b, tt: (b, jnp.maximum(tt * step - 1, 0), 0)),
            # HP rows just after the tile (right halo source; clamped at edge)
            pl.BlockSpec((None, HP, C),
                         lambda b, tt: (b, jnp.minimum(tt * step + step,
                                                       n_hp - 1), 0)),
            pl.BlockSpec((K, C, C), lambda b, tt: (0, 0, 0)),     # W1
            pl.BlockSpec((1, C), lambda b, tt: (0, 0)),           # b1
            pl.BlockSpec((K, C, C), lambda b, tt: (0, 0, 0)),     # W2
            pl.BlockSpec((1, C), lambda b, tt: (0, 0)),           # b2
        ],
        out_specs=pl.BlockSpec((None, t_tile, C), lambda b, tt: (b, tt, 0)),
        scratch_shapes=[
            pltpu.VMEM((t_tile + 2 * HP, C), jnp.bfloat16),   # padded x window
            pltpu.VMEM((t_tile + 2 * p2, C), jnp.bfloat16),   # conv1 output
        ],
    )

    # NOTE: no input_output_aliases -- each tile's halo reads rows owned by the
    # neighbouring tile's output block; donation would race the writeback.
    return pl.pallas_call(
        kernel,
        out_shape=jax.ShapeDtypeStruct((B, T, C), jnp.float32),
        grid_spec=grid_spec,
        compiler_params=pltpu.CompilerParams(
            dimension_semantics=("parallel", "parallel"),
            vmem_limit_bytes=_VMEM_BUDGET),
        cost_estimate=pl.CostEstimate(flops=int(flops), transcendentals=0,
                                      bytes_accessed=int(bytes_accessed)),
    )(x, x, x, w1b, b1r, w2b, b2r)


# ---------------------------------------------------------------------------
# Module: parameters + forward (x in PyTorch Conv1d layout (B, C, T))
# ---------------------------------------------------------------------------
def init_params(key, n_channels, kernel_size, dilations):
    params = []
    for d in dilations:
        key, k1, k2, k3, k4 = jax.random.split(key, 5)
        scale = 1.0 / float(n_channels * kernel_size) ** 0.5
        w1 = jax.random.normal(k1, (kernel_size, n_channels, n_channels),
                               jnp.float32) * scale
        b1 = jax.random.normal(k2, (n_channels,), jnp.float32) * 0.1
        w2 = jax.random.normal(k3, (kernel_size, n_channels, n_channels),
                               jnp.float32) * scale
        b2 = jax.random.normal(k4, (n_channels,), jnp.float32) * 0.1
        params.append((w1, b1, w2, b2, d))
    return params


def resblock_v1_forward(x, params, lrelu_slope, t_tile=None):
    """x: (B, C, T) float32. Returns (B, C, T), matching ResBlockV1.forward."""
    xt = jnp.transpose(x, (0, 2, 1))               # channels-last (B, T, C)
    # TODO(synk): fuse all three stacks into one kernel per T tile (running
    # residual kept in VMEM) to cut HBM traffic ~3x.
    for (w1, b1, w2, b2, d) in params:
        xt = resblock_stack(xt, w1, b1, w2, b2, dilation=d, slope=lrelu_slope,
                            t_tile=t_tile)
    return jnp.transpose(xt, (0, 2, 1))


# ---------------------------------------------------------------------------
# Pure-JAX reference (lax.conv).  mimic_bf16=True applies the same bf16
# rounding points as the kernel (conv inputs, weights, intermediate h).
# ---------------------------------------------------------------------------
def _conv1d_ref(x, w, b, dilation):
    # x: (B, C, T) f32, w: (K, Cin, Cout), b: (Cout,)
    K = w.shape[0]
    pad = get_padding(K, dilation)
    w4 = jnp.transpose(w, (2, 1, 0))[:, :, :, None]    # (Cout, Cin, K, 1)
    x4 = x[:, :, :, None]
    y = jax.lax.conv_general_dilated(
        x4, w4, window_strides=(1, 1), padding=((pad, pad), (0, 0)),
        rhs_dilation=(dilation, 1),
        dimension_numbers=("NCHW", "OIHW", "NCHW"),
        precision=jax.lax.Precision.HIGHEST)
    return y[:, :, :, 0] + b[None, :, None]


def reference_forward(x, params, lrelu_slope, mimic_bf16=True):
    def lrelu(v):
        return jnp.where(v >= 0.0, v, lrelu_slope * v)

    def rnd(a):
        return a.astype(jnp.bfloat16).astype(jnp.float32) if mimic_bf16 else a

    for (w1, b1, w2, b2, d) in params:
        h = lrelu(_conv1d_ref(rnd(x), rnd(w1), b1, d))
        h = lrelu(_conv1d_ref(rnd(h), rnd(w2), b2, 1))
        x = x + h
    return x


if __name__ == "__main__":
    key = jax.random.PRNGKey(0)
    B, C, T = 2, 128, 256                  # small, lane-dense, 8-aligned T
    kernel_size = 3
    dilations = (1, 3, 5)                  # HiFi-GAN ResBlockV1 defaults
    lrelu_slope = 0.1
    t_tile = 64                            # force 4 T-tiles: exercises halos

    kx, kp = jax.random.split(key)
    x = jax.random.normal(kx, (B, C, T), jnp.float32)
    params = init_params(kp, C, kernel_size, dilations)

    y = resblock_v1_forward(x, params, lrelu_slope, t_tile=t_tile)
    y = jax.block_until_ready(y)

    y_ref = reference_forward(x, params, lrelu_slope, mimic_bf16=True)
    assert y.shape == y_ref.shape == (B, C, T), (y.shape, y_ref.shape)
    max_err = float(jnp.max(jnp.abs(y - y_ref)))
    # Intentional precision choice: bf16 MXU inputs + bf16 intermediate.  f32
    # accumulation-order differences can flip bf16 roundings feeding stacks
    # 2/3, so allow a few bf16 ULPs (real bugs show up as errors >= 0.1).
    assert bool(jnp.allclose(y, y_ref, rtol=3e-2, atol=3e-2)), max_err

    print("KERNEL_OK")
</pallas_src>

<mosaic_0001>
module attributes {stable_mosaic.version = 11 : i64} {
  func.func @_resblock_stack_kernel(%arg0: i32, %arg1: i32, %arg2: memref<1x64x128xf32, #tpu.memory_space<vmem>>, %arg3: memref<1x8x128xf32, #tpu.memory_space<vmem>>, %arg4: memref<1x8x128xf32, #tpu.memory_space<vmem>>, %arg5: memref<3x128x128xbf16, #tpu.memory_space<vmem>>, %arg6: memref<1x128xf32, #tpu.memory_space<vmem>>, %arg7: memref<3x128x128xbf16, #tpu.memory_space<vmem>>, %arg8: memref<1x128xf32, #tpu.memory_space<vmem>>, %arg9: memref<1x64x128xf32, #tpu.memory_space<vmem>>, %arg10: memref<80x128xbf16, #tpu.memory_space<vmem>>, %arg11: memref<66x128xbf16, #tpu.memory_space<vmem>>) attributes {dimension_semantics = [#tpu.dimension_semantics<parallel>, #tpu.dimension_semantics<parallel>], iteration_bounds = array<i64: 2, 4>, scalar_prefetch = 0 : i64, scratch_operands = 2 : i64, tpu.core_type = #tpu.core_type<tc>, window_params = [{transform_indices = @transform_0, window_bounds = array<i64: 1, 64, 128>}, {transform_indices = @transform_1, window_bounds = array<i64: 1, 8, 128>}, {transform_indices = @transform_2, window_bounds = array<i64: 1, 8, 128>}, {pipeline_mode = #tpu.pipeline_mode<synchronous>, transform_indices = @transform_3, window_bounds = array<i64: 3, 128, 128>}, {pipeline_mode = #tpu.pipeline_mode<synchronous>, transform_indices = @transform_4, window_bounds = array<i64: 1, 128>}, {pipeline_mode = #tpu.pipeline_mode<synchronous>, transform_indices = @transform_5, window_bounds = array<i64: 3, 128, 128>}, {pipeline_mode = #tpu.pipeline_mode<synchronous>, transform_indices = @transform_6, window_bounds = array<i64: 1, 128>}, {transform_indices = @transform_7, window_bounds = array<i64: 1, 64, 128>}]} {
    %c0 = arith.constant 0 : index
    %c0_0 = arith.constant 0 : index
    %c0_1 = arith.constant 0 : index
    %0 = vector.load %arg2[%c0, %c0_0, %c0_1] : memref<1x64x128xf32, #tpu.memory_space<vmem>>, vector<1x64x128xf32>
    %1 = vector.shape_cast %0 : vector<1x64x128xf32> to vector<64x128xf32>
    %2 = arith.truncf %1 : vector<64x128xf32> to vector<64x128xbf16>
    %c8 = arith.constant 8 : index
    %c0_2 = arith.constant 0 : index
    %3 = vector.load %arg10[%c8, %c0_2] : memref<80x128xbf16, #tpu.memory_space<vmem>>, vector<64x128xbf16>
    tpu.vector_store %arg10[%c8, %c0_2], %2 {strides = array<i32>} : memref<80x128xbf16, #tpu.memory_space<vmem>>, vector<64x128xbf16>,
    %c0_i32 = arith.constant 0 : i32
    %4 = arith.cmpi eq, %arg1, %c0_i32 : i32
    %5 = arith.extui %4 : i1 to i32
    %c0_i32_3 = arith.constant 0 : i32
    %6 = arith.cmpi ne, %5, %c0_i32_3 : i32
    scf.if %6 {
      %cst_62 = arith.constant 0.000000e+00 : bf16
      %78 = vector.broadcast %cst_62 : bf16 to vector<2x128xbf16>
      %c6_63 = arith.constant 6 : index
      %c0_64 = arith.constant 0 : index
      %79 = vector.load %arg10[%c6_63, %c0_64] : memref<80x128xbf16, #tpu.memory_space<vmem>>, vector<2x128xbf16>
      tpu.vector_store %arg10[%c6_63, %c0_64], %78 {strides = array<i32>} : memref<80x128xbf16, #tpu.memory_space<vmem>>, vector<2x128xbf16>,
    } else {
    }
    %c0_i32_4 = arith.constant 0 : i32
    %7 = arith.cmpi sgt, %arg1, %c0_i32_4 : i32
    %8 = arith.extui %7 : i1 to i32
    %c0_i32_5 = arith.constant 0 : i32
    %9 = arith.cmpi ne, %8, %c0_i32_5 : i32
    scf.if %9 {
      %c0_62 = arith.constant 0 : index
      %c6_63 = arith.constant 6 : index
      %c0_64 = arith.constant 0 : index
      %78 = vector.load %arg3[%c0_62, %c6_63, %c0_64] : memref<1x8x128xf32, #tpu.memory_space<vmem>>, vector<1x2x128xf32>
      %79 = vector.shape_cast %78 : vector<1x2x128xf32> to vector<2x128xf32>
      %80 = arith.truncf %79 : vector<2x128xf32> to vector<2x128xbf16>
      %c6_65 = arith.constant 6 : index
      %c0_66 = arith.constant 0 : index
      %81 = vector.load %arg10[%c6_65, %c0_66] : memref<80x128xbf16, #tpu.memory_space<vmem>>, vector<2x128xbf16>
      tpu.vector_store %arg10[%c6_65, %c0_66], %80 {strides = array<i32>} : memref<80x128xbf16, #tpu.memory_space<vmem>>, vector<2x128xbf16>,
    } else {
    }
    %c3_i32 = arith.constant 3 : i32
    %10 = arith.cmpi eq, %arg1, %c3_i32 : i32
    %11 = arith.extui %10 : i1 to i32
    %c0_i32_6 = arith.constant 0 : i32
    %12 = arith.cmpi ne, %11, %c0_i32_6 : i32
    scf.if %12 {
      %cst_62 = arith.constant 0.000000e+00 : bf16
      %78 = vector.broadcast %cst_62 : bf16 to vector<2x128xbf16>
      %c72 = arith.constant 72 : index
      %c0_63 = arith.constant 0 : index
      %79 = vector.load %arg10[%c72, %c0_63] : memref<80x128xbf16, #tpu.memory_space<vmem>>, vector<2x128xbf16>
      tpu.vector_store %arg10[%c72, %c0_63], %78 {strides = array<i32>} : memref<80x128xbf16, #tpu.memory_space<vmem>>, vector<2x128xbf16>,
    } else {
    }
    %c3_i32_7 = arith.constant 3 : i32
    %13 = arith.cmpi slt, %arg1, %c3_i32_7 : i32
    %14 = arith.extui %13 : i1 to i32
    %c0_i32_8 = arith.constant 0 : i32
    %15 = arith.cmpi ne, %14, %c0_i32_8 : i32
    scf.if %15 {
      %c0_62 = arith.constant 0 : index
      %c0_63 = arith.constant 0 : index
      %c0_64 = arith.constant 0 : index
      %78 = vector.load %arg4[%c0_62, %c0_63, %c0_64] : memref<1x8x128xf32, #tpu.memory_space<vmem>>, vector<1x2x128xf32>
      %79 = vector.shape_cast %78 : vector<1x2x128xf32> to vector<2x128xf32>
      %80 = arith.truncf %79 : vector<2x128xf32> to vector<2x128xbf16>
      %c72 = arith.constant 72 : index
      %c0_65 = arith.constant 0 : index
      %81 = vector.load %arg10[%c72, %c0_65] : memref<80x128xbf16, #tpu.memory_space<vmem>>, vector<2x128xbf16>
      tpu.vector_store %arg10[%c72, %c0_65], %80 {strides = array<i32>} : memref<80x128xbf16, #tpu.memory_space<vmem>>, vector<2x128xbf16>,
    } else {
    }
    %cst = arith.constant 0.000000e+00 : f32
    %16 = vector.broadcast %cst : f32 to vector<66x128xf32>
    %c6 = arith.constant 6 : index
    %c0_9 = arith.constant 0 : index
    %17 = vector.load %arg10[%c6, %c0_9] : memref<80x128xbf16, #tpu.memory_space<vmem>>, vector<66x128xbf16>
    %c0_10 = arith.constant 0 : index
    %c0_11 = arith.constant 0 : index
    %c0_12 = arith.constant 0 : index
    %18 = vector.load %arg5[%c0_10, %c0_11, %c0_12] : memref<3x128x128xbf16, #tpu.memory_space<vmem>>, vector<1x128x128xbf16>
    %19 = vector.shape_cast %18 : vector<1x128x128xbf16> to vector<128x128xbf16>
    %cst_13 = arith.constant dense<0.000000e+00> : vector<66x128xf32>
    %20 = tpu.matmul %17, %19, %cst_13 {dimension_numbers = #tpu.dot_dimension_numbers<[1], [0], [0], [1], [0, 0, 1, 1], [], []>} : vector<66x128xbf16>, vector<128x128xbf16>, vector<66x128xf32> -> vector<66x128xf32>
    %21 = arith.addf %16, %20 : vector<66x128xf32>
    %c7 = arith.constant 7 : index
    %c0_14 = arith.constant 0 : index
    %22 = vector.load %arg10[%c7, %c0_14] : memref<80x128xbf16, #tpu.memory_space<vmem>>, vector<66x128xbf16>
    %c1 = arith.constant 1 : index
    %c0_15 = arith.constant 0 : index
    %c0_16 = arith.constant 0 : index
    %23 = vector.load %arg5[%c1, %c0_15, %c0_16] : memref<3x128x128xbf16, #tpu.memory_space<vmem>>, vector<1x128x128xbf16>
    %24 = vector.shape_cast %23 : vector<1x128x128xbf16> to vector<128x128xbf16>
    %cst_17 = arith.constant dense<0.000000e+00> : vector<66x128xf32>
    %25 = tpu.matmul %22, %24, %cst_17 {dimension_numbers = #tpu.dot_dimension_numbers<[1], [0], [0], [1], [0, 0, 1, 1], [], []>} : vector<66x128xbf16>, vector<128x128xbf16>, vector<66x128xf32> -> vector<66x128xf32>
    %26 = arith.addf %21, %25 : vector<66x128xf32>
    %c8_18 = arith.constant 8 : index
    %c0_19 = arith.constant 0 : index
    %27 = vector.load %arg10[%c8_18, %c0_19] : memref<80x128xbf16, #tpu.memory_space<vmem>>, vector<66x128xbf16>
    %c2 = arith.constant 2 : index
    %c0_20 = arith.constant 0 : index
    %c0_21 = arith.constant 0 : index
    %28 = vector.load %arg5[%c2, %c0_20, %c0_21] : memref<3x128x128xbf16, #tpu.memory_space<vmem>>, vector<1x128x128xbf16>
    %29 = vector.shape_cast %28 : vector<1x128x128xbf16> to vector<128x128xbf16>
    %cst_22 = arith.constant dense<0.000000e+00> : vector<66x128xf32>
    %30 = tpu.matmul %27, %29, %cst_22 {dimension_numbers = #tpu.dot_dimension_numbers<[1], [0], [0], [1], [0, 0, 1, 1], [], []>} : vector<66x128xbf16>, vector<128x128xbf16>, vector<66x128xf32> -> vector<66x128xf32>
    %31 = arith.addf %26, %30 : vector<66x128xf32>
    %c0_23 = arith.constant 0 : index
    %c0_24 = arith.constant 0 : index
    %32 = vector.load %arg6[%c0_23, %c0_24] : memref<1x128xf32, #tpu.memory_space<vmem>>, vector<1x128xf32>
    %33 = vector.broadcast %32 : vector<1x128xf32> to vector<66x128xf32>
    %34 = arith.addf %31, %33 : vector<66x128xf32>
    %cst_25 = arith.constant 0.000000e+00 : f32
    %35 = vector.broadcast %cst_25 : f32 to vector<66x128xf32>
    %36 = arith.cmpf oge, %34, %35 : vector<66x128xf32>
    %cst_26 = arith.constant 1.000000e-01 : f32
    %37 = vector.broadcast %cst_26 : f32 to vector<66x128xf32>
    %38 = arith.mulf %37, %34 : vector<66x128xf32>
    %39 = arith.select %36, %34, %38 : vector<66x128xi1>, vector<66x128xf32>
    %40 = arith.truncf %39 : vector<66x128xf32> to vector<66x128xbf16>
    %c0_27 = arith.constant 0 : index
    %c0_28 = arith.constant 0 : index
    %41 = vector.load %arg11[%c0_27, %c0_28] : memref<66x128xbf16, #tpu.memory_space<vmem>>, vector<66x128xbf16>
    tpu.vector_store %arg11[%c0_27, %c0_28], %40 {strides = array<i32>} : memref<66x128xbf16, #tpu.memory_space<vmem>>, vector<66x128xbf16>,
    %c0_i32_29 = arith.constant 0 : i32
    %42 = arith.cmpi eq, %arg1, %c0_i32_29 : i32
    %43 = arith.extui %42 : i1 to i32
    %c0_i32_30 = arith.constant 0 : i32
    %44 = arith.cmpi ne, %43, %c0_i32_30 : i32
    scf.if %44 {
      %cst_62 = arith.constant 0.000000e+00 : bf16
      %78 = vector.broadcast %cst_62 : bf16 to vector<1x128xbf16>
      %c0_63 = arith.constant 0 : index
      %c0_64 = arith.constant 0 : index
      %79 = vector.load %arg11[%c0_63, %c0_64] : memref<66x128xbf16, #tpu.memory_space<vmem>>, vector<1x128xbf16>
      tpu.vector_store %arg11[%c0_63, %c0_64], %78 {strides = array<i32>} : memref<66x128xbf16, #tpu.memory_space<vmem>>, vector<1x128xbf16>,
    } else {
    }
    %c3_i32_31 = arith.constant 3 : i32
    %45 = arith.cmpi eq, %arg1, %c3_i32_31 : i32
    %46 = arith.extui %45 : i1 to i32
    %c0_i32_32 = arith.constant 0 : i32
    %47 = arith.cmpi ne, %46, %c0_i32_32 : i32
    scf.if %47 {
      %cst_62 = arith.constant 0.000000e+00 : bf16
      %78 = vector.broadcast %cst_62 : bf16 to vector<1x128xbf16>
      %c65 = arith.constant 65 : index
      %c0_63 = arith.constant 0 : index
      %79 = vector.load %arg11[%c65, %c0_63] : memref<66x128xbf16, #tpu.memory_space<vmem>>, vector<1x128xbf16>
      tpu.vector_store %arg11[%c65, %c0_63], %78 {strides = array<i32>} : memref<66x128xbf16, #tpu.memory_space<vmem>>, vector<1x128xbf16>,
    } else {
    }
    %cst_33 = arith.constant 0.000000e+00 : f32
    %48 = vector.broadcast %cst_33 : f32 to vector<64x128xf32>
    %c0_34 = arith.constant 0 : index
    %c0_35 = arith.constant 0 : index
    %49 = vector.load %arg11[%c0_34, %c0_35] : memref<66x128xbf16, #tpu.memory_space<vmem>>, vector<64x128xbf16>
    %c0_36 = arith.constant 0 : index
    %c0_37 = arith.constant 0 : index
    %c0_38 = arith.constant 0 : index
    %50 = vector.load %arg7[%c0_36, %c0_37, %c0_38] : memref<3x128x128xbf16, #tpu.memory_space<vmem>>, vector<1x128x128xbf16>
    %51 = vector.shape_cast %50 : vector<1x128x128xbf16> to vector<128x128xbf16>
    %cst_39 = arith.constant dense<0.000000e+00> : vector<64x128xf32>
    %52 = tpu.matmul %49, %51, %cst_39 {dimension_numbers = #tpu.dot_dimension_numbers<[1], [0], [0], [1], [0, 0, 1, 1], [], []>} : vector<64x128xbf16>, vector<128x128xbf16>, vector<64x128xf32> -> vector<64x128xf32>
    %53 = arith.addf %48, %52 : vector<64x128xf32>
    %c1_40 = arith.constant 1 : index
    %c0_41 = arith.constant 0 : index
    %54 = vector.load %arg11[%c1_40, %c0_41] : memref<66x128xbf16, #tpu.memory_space<vmem>>, vector<64x128xbf16>
    %c1_42 = arith.constant 1 : index
    %c0_43 = arith.constant 0 : index
    %c0_44 = arith.constant 0 : index
    %55 = vector.load %arg7[%c1_42, %c0_43, %c0_44] : memref<3x128x128xbf16, #tpu.memory_space<vmem>>, vector<1x128x128xbf16>
    %56 = vector.shape_cast %55 : vector<1x128x128xbf16> to vector<128x128xbf16>
    %cst_45 = arith.constant dense<0.000000e+00> : vector<64x128xf32>
    %57 = tpu.matmul %54, %56, %cst_45 {dimension_numbers = #tpu.dot_dimension_numbers<[1], [0], [0], [1], [0, 0, 1, 1], [], []>} : vector<64x128xbf16>, vector<128x128xbf16>, vector<64x128xf32> -> vector<64x128xf32>
    %58 = arith.addf %53, %57 : vector<64x128xf32>
    %c2_46 = arith.constant 2 : index
    %c0_47 = arith.constant 0 : index
    %59 = vector.load %arg11[%c2_46, %c0_47] : memref<66x128xbf16, #tpu.memory_space<vmem>>, vector<64x128xbf16>
    %c2_48 = arith.constant 2 : index
    %c0_49 = arith.constant 0 : index
    %c0_50 = arith.constant 0 : index
    %60 = vector.load %arg7[%c2_48, %c0_49, %c0_50] : memref<3x128x128xbf16, #tpu.memory_space<vmem>>, vector<1x128x128xbf16>
    %61 = vector.shape_cast %60 : vector<1x128x128xbf16> to vector<128x128xbf16>
    %cst_51 = arith.constant dense<0.000000e+00> : vector<64x128xf32>
    %62 = tpu.matmul %59, %61, %cst_51 {dimension_numbers = #tpu.dot_dimension_numbers<[1], [0], [0], [1], [0, 0, 1, 1], [], []>} : vector<64x128xbf16>, vector<128x128xbf16>, vector<64x128xf32> -> vector<64x128xf32>
    %63 = arith.addf %58, %62 : vector<64x128xf32>
    %c0_52 = arith.constant 0 : index
    %c0_53 = arith.constant 0 : index
    %64 = vector.load %arg8[%c0_52, %c0_53] : memref<1x128xf32, #tpu.memory_space<vmem>>, vector<1x128xf32>
    %65 = vector.broadcast %64 : vector<1x128xf32> to vector<64x128xf32>
    %66 = arith.addf %63, %65 : vector<64x128xf32>
    %cst_54 = arith.constant 0.000000e+00 : f32
    %67 = vector.broadcast %cst_54 : f32 to vector<64x128xf32>
    %68 = arith.cmpf oge, %66, %67 : vector<64x128xf32>
    %cst_55 = arith.constant 1.000000e-01 : f32
    %69 = vector.broadcast %cst_55 : f32 to vector<64x128xf32>
    %70 = arith.mulf %69, %66 : vector<64x128xf32>
    %71 = arith.select %68, %66, %70 : vector<64x128xi1>, vector<64x128xf32>
    %c0_56 = arith.constant 0 : index
    %c0_57 = arith.constant 0 : index
    %c0_58 = arith.constant 0 : index
    %72 = vector.load %arg2[%c0_56, %c0_57, %c0_58] : memref<1x64x128xf32, #tpu.memory_space<vmem>>, vector<1x64x128xf32>
    %73 = vector.shape_cast %72 : vector<1x64x128xf32> to vector<64x128xf32>
    %74 = arith.addf %73, %71 : vector<64x128xf32>
    %c0_59 = arith.constant 0 : index
    %c0_60 = arith.constant 0 : index
    %c0_61 = arith.constant 0 : index
    %75 = vector.load %arg9[%c0_59, %c0_60, %c0_61] : memref<1x64x128xf32, #tpu.memory_space<vmem>>, vector<1x64x128xf32>
    %76 = vector.shape_cast %75 : vector<1x64x128xf32> to vector<64x128xf32>
    %77 = vector.shape_cast %74 : vector<64x128xf32> to vector<1x64x128xf32>
    tpu.vector_store %arg9[%c0_59, %c0_60, %c0_61], %77 {strides = array<i32>} : memref<1x64x128xf32, #tpu.memory_space<vmem>>, vector<1x64x128xf32>,
    return
  }
  func.func @transform_0(%arg0: i32, %arg1: i32) -> (i32, i32, i32) {
    %c0_i32 = arith.constant 0 : i32
    %c0_i32_0 = arith.constant 0 : i32
    return %arg0, %arg1, %c0_i32 : i32, i32, i32
  }
  func.func @transform_1(%arg0: i32, %arg1: i32) -> (i32, i32, i32) {
    %c8_i32 = arith.constant 8 : i32
    %0 = arith.muli %arg1, %c8_i32 : i32
    %c1_i32 = arith.constant 1 : i32
    %1 = arith.subi %0, %c1_i32 : i32
    %c0_i32 = arith.constant 0 : i32
    %2 = arith.maxsi %1, %c0_i32 : i32
    %c0_i32_0 = arith.constant 0 : i32
    %c0_i32_1 = arith.constant 0 : i32
    return %arg0, %2, %c0_i32_0 : i32, i32, i32
  }
  func.func @transform_2(%arg0: i32, %arg1: i32) -> (i32, i32, i32) {
    %c8_i32 = arith.constant 8 : i32
    %0 = arith.muli %arg1, %c8_i32 : i32
    %c8_i32_0 = arith.constant 8 : i32
    %1 = arith.addi %0, %c8_i32_0 : i32
    %c31_i32 = arith.constant 31 : i32
    %2 = arith.minsi %1, %c31_i32 : i32
    %c0_i32 = arith.constant 0 : i32
    %c0_i32_1 = arith.constant 0 : i32
    return %arg0, %2, %c0_i32 : i32, i32, i32
  }
  func.func @transform_3(%arg0: i32, %arg1: i32) -> (i32, i32, i32) {
    %c0_i32 = arith.constant 0 : i32
    %c0_i32_0 = arith.constant 0 : i32
    %c0_i32_1 = arith.constant 0 : i32
    %c0_i32_2 = arith.constant 0 : i32
    return %c0_i32, %c0_i32_0, %c0_i32_1 : i32, i32, i32
  }
  func.func @transform_4(%arg0: i32, %arg1: i32) -> (i32, i32) {
    %c0_i32 = arith.constant 0 : i32
    %c0_i32_0 = arith.constant 0 : i32
    %c0_i32_1 = arith.constant 0 : i32
    return %c0_i32, %c0_i32_0 : i32, i32
  }
  func.func @transform_5(%arg0: i32, %arg1: i32) -> (i32, i32, i32) {
    %c0_i32 = arith.constant 0 : i32
    %c0_i32_0 = arith.constant 0 : i32
    %c0_i32_1 = arith.constant 0 : i32
    %c0_i32_2 = arith.constant 0 : i32
    return %c0_i32, %c0_i32_0, %c0_i32_1 : i32, i32, i32
  }
  func.func @transform_6(%arg0: i32, %arg1: i32) -> (i32, i32) {
    %c0_i32 = arith.constant 0 : i32
    %c0_i32_0 = arith.constant 0 : i32
    %c0_i32_1 = arith.constant 0 : i32
    return %c0_i32, %c0_i32_0 : i32, i32
  }
  func.func @transform_7(%arg0: i32, %arg1: i32) -> (i32, i32, i32) {
    %c0_i32 = arith.constant 0 : i32
    %c0_i32_0 = arith.constant 0 : i32
    return %arg0, %arg1, %c0_i32 : i32, i32, i32
  }
}

</mosaic_0001>

<llo_original>
// kernel: tpu_custom_call.1
$region0: #{tpu_custom_call.1}
  #allocation0 [shape = 'u32[]', space=smem, size = 0x4, offset = 0x4, fixed_abs, tag = 'smem constant byte address 0x4 - core index']
  #allocation1 [shape = 'u32[144,128]{1,0:T(1,128)}', space=vmem, size = 0x12000, scoped, tag = 'internal scratch']
  #allocation2 [shape = 'bf16[80,128]{1,0:T(16,128)(2,1)}', space=vmem, size = 0x5000, scoped, tag = 'scratch operand']
  #allocation3 [shape = 'bf16[66,128]{1,0:T(8,128)(2,1)}', space=vmem, size = 0x4800, scoped, tag = 'scratch operand']
  %s0 = inlined_call_operand.hbm [shape: f32[2,256,128], index: 0, kind: input, shape index: {}]
  %s1 = inlined_call_operand.hbm [shape: f32[2,256,128], index: 1, kind: input, shape index: {}]
  %s2 = inlined_call_operand.hbm [shape: f32[2,256,128], index: 2, kind: input, shape index: {}]
  %s3 = inlined_call_operand.hbm [shape: bf16[3,128,128], index: 3, kind: input, shape index: {}]
  %s4 = inlined_call_operand.vmem [shape: f32[1,128], index: 4, kind: input, shape index: {}]
  %s5 = inlined_call_operand.hbm [shape: bf16[3,128,128], index: 5, kind: input, shape index: {}]
  %s6 = inlined_call_operand.vmem [shape: f32[1,128], index: 6, kind: input, shape index: {}]
  %s7 = inlined_call_operand.hbm [shape: f32[2,256,128], index: 7, kind: output, shape index: {}]
  %s8 = sld [smem:[#allocation0]]
  $region105: #{tpu_custom_call.1} parent=0
    _
  %s10 = ssub.s32 1, %s8
  %s11 = scalar_select 0, %s10, %s8
  $region1: #{tpu_custom_call.1} parent=0
    #allocation4 [shape = 'u8[65536]{0}', space=vmem, size = 0x10000, scoped, tag = 'input window, operand 0']
    #allocation5 [shape = 's32[2]{0}', space=sflag, size = 0x8, scoped, tag = 'scoped memory for tpu_custom_call.1']
    #allocation6 [shape = 's32[2]{0}', space=sflag, size = 0x8, scoped, tag = 'scoped memory for tpu_custom_call.1']
    #allocation7 [shape = 'u8[8192]{0}', space=vmem, size = 0x2000, scoped, tag = 'input window, operand 1']
    #allocation8 [shape = 's32[2]{0}', space=sflag, size = 0x8, scoped, tag = 'scoped memory for tpu_custom_call.1']
    #allocation9 [shape = 'u8[8192]{0}', space=vmem, size = 0x2000, scoped, tag = 'input window, operand 2']
    #allocation10 [shape = 'u8[98304]{0}', space=vmem, size = 0x18000, scoped, tag = 'input window, operand 3, single buffered']
    #allocation11 [shape = 's32[1]{0}', space=sflag, size = 0x4, scoped, tag = 'scoped memory for tpu_custom_call.1']
    #allocation12 [shape = 'u8[98304]{0}', space=vmem, size = 0x18000, scoped, tag = 'input window, operand 5, single buffered']
    #allocation13 [shape = 'u8[65536]{0}', space=vmem, size = 0x10000, scoped, tag = 'output window, operand 0']
    %12 = vsyncpa [#allocation5], 0
    %s13 = scalar_lea.sflag [#allocation5], 1
    %14 = vsyncpa %s13, 0
    %15 = vsyncpa [#allocation8], 0
    %s16 = scalar_lea.sflag [#allocation8], 1
    %17 = vsyncpa %s16, 0
    %18 = vsyncpa [#allocation11], 0
    %19 = vsyncpa [#allocation6], 0
    %s20 = scalar_lea.sflag [#allocation6], 1
    %21 = vsyncpa %s20, 0
    loop: start=0, step=1, limit=10
    $region2: #{tpu_custom_call.1} parent=1 // loop_pre_header
      _
    $region3: #{tpu_custom_call.1} parent=1 // loop_header
      %s23 = sphi 0, %s27
      %p24 = scmp.ge.s32.totalorder %s23, 10
      %s30 = sphi 0, %s42
      %s31 = sphi 0, %s38
      %s32 = sphi 0, %s30
      %s33 = sphi 0, %s31
      %s34 = sphi 0, %s32
      %s35 = sphi 0, %s33
      %s47 = sphi 0, %s49
      %s50 = sphi 0, %s47
      %s51 = sphi 0, %s50
      %s67 = sphi 0, %s51
      %s83 = sphi 0, %s85
      %s86 = sphi 0, %s83
      %s87 = sphi 0, %s86
      %s103 = sphi 0, %s87
      %s119 = sphi 0, %s121
      %s122 = sphi 0, %s119
      %s123 = sphi 0, %s122
      %s139 = sphi 0, %s123
      %s143 = sphi 0, %s143
      %s145 = sphi 0, %s143
      %s146 = sphi 0, %s145
      %s160 = sphi 0, %s146
      %s164 = sphi 0, %s164
      %s166 = sphi 0, %s164
      %s167 = sphi 0, %s166
      %s181 = sphi 0, %s167
      %s185 = sphi 0, %s185
      %s187 = sphi 0, %s185
      %s188 = sphi 0, %s187
      %s202 = sphi 0, %s188
      %s206 = sphi 0, %s206
      %s208 = sphi 0, %s206
      %s209 = sphi 0, %s208
      %s223 = sphi 0, %s209
      %s231 = sphi 0, %s233
      %s234 = sphi 0, %s231
      %s235 = sphi 0, %s234
      %s251 = sphi 0, %s235
    $region4: #{tpu_custom_call.1} parent=1 // loop_header_branch
      %26 = sbr.rel (%p24) target = $region8
    $region5: #{tpu_custom_call.1} parent=1 // loop_body
      %s28 = ssub.s32 %s23, 1
      %s29 = ssub.s32 %s23, 2
      %s36 = sadd.s32 1, %s31
      %p37 = scmp.ge.s32.totalorder %s36, 4
      %s38 = scalar_select %p37, 0, %s36
      %s39 = sadd.s32 1, %s30
      %s40 = scalar_select %p37, %s39, %s30
      %p41 = scmp.ge.s32.totalorder %s40, 2
      %s42 = scalar_select %p41, 0, %s40
      %s43 = ssub.s32 %s30, %s42
      %s44 = ssub.s32 %s31, %s38
      %s45 = sor.u32 %s43, %s44
      %p46 = scmp.eq.s32.totalorder %s45, 0
      %s48 = sadd.s32 %s47, 1
      %s49 = scalar_select %p46, %s47, %s48
      %p52 = pneg %p46
      %p53 = scmp.eq.s32.totalorder %s23, 7
      %p54 = por %p52, %p53
      %p55 = scmp.ne.s32.totalorder %s47, %s50
      %p56 = scmp.eq.s32.totalorder %s23, 0
      %p57 = por %p55, %p56
      %p58 = scmp.ne.s32.totalorder %s47, %s50
      %p59 = scmp.eq.s32.totalorder %s28, 7
      %p60 = por %p58, %p59
      %p61 = scmp.ne.s32.totalorder %s50, %s51
      %p62 = scmp.eq.s32.totalorder %s28, 0
      %p63 = por %p61, %p62
      %p64 = scmp.ne.s32.totalorder %s50, %s51
      %p65 = scmp.eq.s32.totalorder %s29, 7
      %p66 = por %p64, %p65
      %p68 = scmp.ne.s32.totalorder %s51, %s67
      %p69 = scmp.eq.s32.totalorder %s29, 0
      %p70 = por %p68, %p69
      %s71 = smul.u32 %s31, 8
      %s72 = ssub.s32 %s71, 1
      %p73 = scmp.gt.s32.totalorder %s72, 0
      %s74 = scalar_select %p73, %s72, 0
      %s75 = smul.u32 %s38, 8
      %s76 = ssub.s32 %s75, 1
      %p77 = scmp.gt.s32.totalorder %s76, 0
      %s78 = scalar_select %p77, %s76, 0
      %s79 = ssub.s32 %s30, %s42
      %s80 = ssub.s32 %s74, %s78
      %s81 = sor.u32 %s79, %s80
      %p82 = scmp.eq.s32.totalorder %s81, 0
      %s84 = sadd.s32 %s83, 1
      %s85 = scalar_select %p82, %s83, %s84
      %p88 = pneg %p82
      %p89 = scmp.eq.s32.totalorder %s23, 7
      %p90 = por %p88, %p89
      %p91 = scmp.ne.s32.totalorder %s83, %s86
      %p92 = scmp.eq.s32.totalorder %s23, 0
      %p93 = por %p91, %p92
      %p94 = scmp.ne.s32.totalorder %s83, %s86
      %p95 = scmp.eq.s32.totalorder %s28, 7
      %p96 = por %p94, %p95
      %p97 = scmp.ne.s32.totalorder %s86, %s87
      %p98 = scmp.eq.s32.totalorder %s28, 0
      %p99 = por %p97, %p98
      %p100 = scmp.ne.s32.totalorder %s86, %s87
      %p101 = scmp.eq.s32.totalorder %s29, 7
      %p102 = por %p100, %p101
      %p104 = scmp.ne.s32.totalorder %s87, %s103
      %p105 = scmp.eq.s32.totalorder %s29, 0
      %p106 = por %p104, %p105
      %s107 = smul.u32 %s31, 8
      %s108 = sadd.s32 %s107, 8
      %p109 = scmp.lt.s32.totalorder %s108, 31
      %s110 = scalar_select %p109, %s108, 31
      %s111 = smul.u32 %s38, 8
      %s112 = sadd.s32 %s111, 8
      %p113 = scmp.lt.s32.totalorder %s112, 31
      %s114 = scalar_select %p113, %s112, 31
      %s115 = ssub.s32 %s30, %s42
      %s116 = ssub.s32 %s110, %s114
      %s117 = sor.u32 %s115, %s116
      %p118 = scmp.eq.s32.totalorder %s117, 0
      %s120 = sadd.s32 %s119, 1
      %s121 = scalar_select %p118, %s119, %s120
      %p124 = pneg %p118
      %p125 = scmp.eq.s32.totalorder %s23, 7
      %p126 = por %p124, %p125
      %p127 = scmp.ne.s32.totalorder %s119, %s122
      %p128 = scmp.eq.s32.totalorder %s23, 0
      %p129 = por %p127, %p128
      %p130 = scmp.ne.s32.totalorder %s119, %s122
      %p131 = scmp.eq.s32.totalorder %s28, 7
      %p132 = por %p130, %p131
      %p133 = scmp.ne.s32.totalorder %s122, %s123
      %p134 = scmp.eq.s32.totalorder %s28, 0
      %p135 = por %p133, %p134
      %p136 = scmp.ne.s32.totalorder %s122, %s123
      %p137 = scmp.eq.s32.totalorder %s29, 7
      %p138 = por %p136, %p137
      %p140 = scmp.ne.s32.totalorder %s123, %s139
      %p141 = scmp.eq.s32.totalorder %s29, 0
      %p142 = por %p140, %p141
      %s144 = sadd.s32 %s143, 1
      %p147 = scmp.eq.s32.totalorder %s23, 7
      %p148 = scmp.ne.s32.totalorder %s143, %s145
      %p149 = scmp.eq.s32.totalorder %s23, 0
      %p150 = por %p148, %p149
      %p151 = scmp.ne.s32.totalorder %s143, %s145
      %p152 = scmp.eq.s32.totalorder %s28, 7
      %p153 = por %p151, %p152
      %p154 = scmp.ne.s32.totalorder %s145, %s146
      %p155 = scmp.eq.s32.totalorder %s28, 0
      %p156 = por %p154, %p155
      %p157 = scmp.ne.s32.totalorder %s145, %s146
      %p158 = scmp.eq.s32.totalorder %s29, 7
      %p159 = por %p157, %p158
      %p161 = scmp.ne.s32.totalorder %s146, %s160
      %p162 = scmp.eq.s32.totalorder %s29, 0
      %p163 = por %p161, %p162
      %s165 = sadd.s32 %s164, 1
      %p168 = scmp.eq.s32.totalorder %s23, 7
      %p169 = scmp.ne.s32.totalorder %s164, %s166
      %p170 = scmp.eq.s32.totalorder %s23, 0
      %p171 = por %p169, %p170
      %p172 = scmp.ne.s32.totalorder %s164, %s166
      %p173 = scmp.eq.s32.totalorder %s28, 7
      %p174 = por %p172, %p173
      %p175 = scmp.ne.s32.totalorder %s166, %s167
      %p176 = scmp.eq.s32.totalorder %s28, 0
      %p177 = por %p175, %p176
      %p178 = scmp.ne.s32.totalorder %s166, %s167
      %p179 = scmp.eq.s32.totalorder %s29, 7
      %p180 = por %p178, %p179
      %p182 = scmp.ne.s32.totalorder %s167, %s181
      %p183 = scmp.eq.s32.totalorder %s29, 0
      %p184 = por %p182, %p183
      %s186 = sadd.s32 %s185, 1
      %p189 = scmp.eq.s32.totalorder %s23, 7
      %p190 = scmp.ne.s32.totalorder %s185, %s187
      %p191 = scmp.eq.s32.totalorder %s23, 0
      %p192 = por %p190, %p191
      %p193 = scmp.ne.s32.totalorder %s185, %s187
      %p194 = scmp.eq.s32.totalorder %s28, 7
      %p195 = por %p193, %p194
      %p196 = scmp.ne.s32.totalorder %s187, %s188
      %p197 = scmp.eq.s32.totalorder %s28, 0
      %p198 = por %p196, %p197
      %p199 = scmp.ne.s32.totalorder %s187, %s188
      %p200 = scmp.eq.s32.totalorder %s29, 7
      %p201 = por %p199, %p200
      %p203 = scmp.ne.s32.totalorder %s188, %s202
      %p204 = scmp.eq.s32.totalorder %s29, 0
      %p205 = por %p203, %p204
      %s207 = sadd.s32 %s206, 1
      %p210 = scmp.eq.s32.totalorder %s23, 7
      %p211 = scmp.ne.s32.totalorder %s206, %s208
      %p212 = scmp.eq.s32.totalorder %s23, 0
      %p213 = por %p211, %p212
      %p214 = scmp.ne.s32.totalorder %s206, %s208
      %p215 = scmp.eq.s32.totalorder %s28, 7
      %p216 = por %p214, %p215
      %p217 = scmp.ne.s32.totalorder %s208, %s209
      %p218 = scmp.eq.s32.totalorder %s28, 0
      %p219 = por %p217, %p218
      %p220 = scmp.ne.s32.totalorder %s208, %s209
      %p221 = scmp.eq.s32.totalorder %s29, 7
      %p222 = por %p220, %p221
      %p224 = scmp.ne.s32.totalorder %s209, %s223
      %p225 = scmp.eq.s32.totalorder %s29, 0
      %p226 = por %p224, %p225
      %s227 = ssub.s32 %s30, %s42
      %s228 = ssub.s32 %s31, %s38
      %s229 = sor.u32 %s227, %s228
      %p230 = scmp.eq.s32.totalorder %s229, 0
      %s232 = sadd.s32 %s231, 1
      %s233 = scalar_select %p230, %s231, %s232
      %p236 = pneg %p230
      %p237 = scmp.eq.s32.totalorder %s23, 7
      %p238 = por %p236, %p237
      %p239 = scmp.ne.s32.totalorder %s231, %s234
      %p240 = scmp.eq.s32.totalorder %s23, 0
      %p241 = por %p239, %p240
      %p242 = scmp.ne.s32.totalorder %s231, %s234
      %p243 = scmp.eq.s32.totalorder %s28, 7
      %p244 = por %p242, %p243
      %p245 = scmp.ne.s32.totalorder %s234, %s235
      %p246 = scmp.eq.s32.totalorder %s28, 0
      %p247 = por %p245, %p246
      %p248 = scmp.ne.s32.totalorder %s234, %s235
      %p249 = scmp.eq.s32.totalorder %s29, 7
      %p250 = por %p248, %p249
      %p252 = scmp.ne.s32.totalorder %s235, %s251
      %p253 = scmp.eq.s32.totalorder %s29, 0
      %p254 = por %p252, %p253
      %p255 = scmp.le.s32.totalorder 1, %s23
      %p256 = scmp.lt.s32.totalorder %s23, 9
      %p257 = pnand %p255, %p256
      %p258 = pneg %p257
      // Predicated region
      $region9: #{tpu_custom_call.1} parent=5 // pred_check
        _
      $region10: #{tpu_custom_call.1} parent=5 // pred_check_branch
        %260 = sbr.rel (%p257) target = $region12
      $region11: #{tpu_custom_call.1} parent=5 // pred_region
        %s261 = ssub.s32 %s23, 1
        // Predicated region
        $region13: #{tpu_custom_call.1} parent=11 // pred_check
          %p262 = pneg %p156
        $region14: #{tpu_custom_call.1} parent=11 // pred_check_branch
          %264 = sbr.rel (%p262) target = $region16
        $region15: #{tpu_custom_call.1} parent=11 // pred_region
          %s266 = ssub.s32 3072, 3072
          %267 = vsyncadd [#allocation11], %s266
          %s268 = sshll.u32 [#allocation10], 4
          %s269 = int_to_ptr.vmem [resolvable:$true] %s268
          %274 = dma.hbm_to_vmem [thread:$0]  %s3, 3072, %s269, [#allocation11], 64, 64, 4
        $region16: #{tpu_custom_call.1} parent=11 // pred_fallthru
          _
        // Predicated region
        $region17: #{tpu_custom_call.1} parent=11 // pred_check
          %p275 = pneg %p177
        $region18: #{tpu_custom_call.1} parent=11 // pred_check_branch
          %277 = sbr.rel (%p275) target = $region20
        $region19: #{tpu_custom_call.1} parent=11 // pred_region
          _
        $region20: #{tpu_custom_call.1} parent=11 // pred_fallthru
          _
        // Predicated region
        $region21: #{tpu_custom_call.1} parent=11 // pred_check
          %p278 = pneg %p198
        $region22: #{tpu_custom_call.1} parent=11 // pred_check_branch
          %280 = sbr.rel (%p278) target = $region24
        $region23: #{tpu_custom_call.1} parent=11 // pred_region
          %s282 = ssub.s32 3072, 3072
          %283 = vsyncadd [#allocation11], %s282
          %s284 = sshll.u32 [#allocation12], 4
          %s285 = int_to_ptr.vmem [resolvable:$true] %s284
          %290 = dma.hbm_to_vmem [thread:$0]  %s5, 3072, %s285, [#allocation11], 64, 64, 4
        $region24: #{tpu_custom_call.1} parent=11 // pred_fallthru
          _
        // Predicated region
        $region25: #{tpu_custom_call.1} parent=11 // pred_check
          %p291 = pneg %p219
        $region26: #{tpu_custom_call.1} parent=11 // pred_check_branch
          %293 = sbr.rel (%p291) target = $region28
        $region27: #{tpu_custom_call.1} parent=11 // pred_region
          _
        $region28: #{tpu_custom_call.1} parent=11 // pred_fallthru
          _
      $region12: #{tpu_custom_call.1} parent=5 // pred_fallthru
        _
      %p294 = scmp.lt.s32.totalorder %s23, 8
      // Predicated region
      $region29: #{tpu_custom_call.1} parent=5 // pred_check
        %p295 = pneg %p294
      $region30: #{tpu_custom_call.1} parent=5 // pred_check_branch
        %297 = sbr.rel (%p295) target = $region32
      $region31: #{tpu_custom_call.1} parent=5 // pred_region
        // Predicated region
        $region33: #{tpu_custom_call.1} parent=31 // pred_check
          %p298 = pneg %p57
        $region34: #{tpu_custom_call.1} parent=31 // pred_check_branch
          %300 = sbr.rel (%p298) target = $region36
        $region35: #{tpu_custom_call.1} parent=31 // pred_region
          %s301 = sand.u32 %s47, 1
          %s302 = scalar_lea.sflag [#allocation5], %s301
          %s303 = sand.u32 %s47, 1
          %s304 = smul.addr %s303, 64
          %s305 = scalar_lea.vmem [#allocation4], %s304
          %s306 = smul.u32 8, %s31
          %s308 = ssub.s32 1024, 1024
          %309 = vsyncadd %s302, %s308
          %s310 = smul.addr %s30, 32
          %s311 = sadd.s32 %s306, %s310
          %s312 = smul.addr %s311, 128
          %s313 = scalar_lea.hbm %s0, %s312
          %s314 = sshll.u32 %s305, 4
          %s315 = int_to_ptr.vmem [resolvable:$true] %s314
          %320 = dma.hbm_to_vmem [thread:$0]  %s313, 1024, %s315, %s302, 128, 128, 8
        $region36: #{tpu_custom_call.1} parent=31 // pred_fallthru
          _
        // Predicated region
        $region37: #{tpu_custom_call.1} parent=31 // pred_check
          %p321 = pneg %p93
        $region38: #{tpu_custom_call.1} parent=31 // pred_check_branch
          %323 = sbr.rel (%p321) target = $region40
        $region39: #{tpu_custom_call.1} parent=31 // pred_region
          %s324 = sand.u32 %s23, 1
          %s325 = scalar_lea.sflag [#allocation8], %s324
          %s326 = sand.u32 %s83, 1
          %s327 = smul.addr %s326, 8
          %s328 = scalar_lea.vmem [#allocation7], %s327
          %s329 = smul.u32 %s31, 8
          %s330 = ssub.s32 %s329, 1
          %p331 = scmp.gt.s32.totalorder %s330, 0
          %s332 = scalar_select %p331, %s330, 0
          %s334 = ssub.s32 128, 128
          %335 = vsyncadd %s325, %s334
          %s336 = smul.addr %s30, 32
          %s337 = sadd.s32 %s332, %s336
          %s338 = smul.addr %s337, 128
          %s339 = scalar_lea.hbm %s1, %s338
          %s341 = sshll.u32 %s328, 4
          %s342 = int_to_ptr.vmem [resolvable:$true] %s341
          %344 = dma.hbm_to_vmem [thread:$0]  %s339, 128, %s342, %s325
        $region40: #{tpu_custom_call.1} parent=31 // pred_fallthru
          _
        // Predicated region
        $region41: #{tpu_custom_call.1} parent=31 // pred_check
          %p345 = pneg %p129
        $region42: #{tpu_custom_call.1} parent=31 // pred_check_branch
          %347 = sbr.rel (%p345) target = $region44
        $region43: #{tpu_custom_call.1} parent=31 // pred_region
          %s348 = sand.u32 %s23, 1
          %s349 = scalar_lea.sflag [#allocation8], %s348
          %s350 = sand.u32 %s119, 1
          %s351 = smul.addr %s350, 8
          %s352 = scalar_lea.vmem [#allocation9], %s351
          %s353 = smul.u32 %s31, 8
          %s354 = sadd.s32 %s353, 8
          %p355 = scmp.lt.s32.totalorder %s354, 31
          %s356 = scalar_select %p355, %s354, 31
          %s358 = ssub.s32 128, 128
          %359 = vsyncadd %s349, %s358
          %s360 = smul.addr %s30, 32
          %s361 = sadd.s32 %s356, %s360
          %s362 = smul.addr %s361, 128
          %s363 = scalar_lea.hbm %s2, %s362
          %s365 = sshll.u32 %s352, 4
          %s366 = int_to_ptr.vmem [resolvable:$true] %s365
          %368 = dma.hbm_to_vmem [thread:$0]  %s363, 128, %s366, %s349
        $region44: #{tpu_custom_call.1} parent=31 // pred_fallthru
          _
      $region32: #{tpu_custom_call.1} parent=5 // pred_fallthru
        _
      %p369 = scmp.le.s32.totalorder 1, %s23
      %p370 = scmp.lt.s32.totalorder %s23, 9
      %p371 = pnand %p369, %p370
      %p372 = pneg %p371
      // Predicated region
      $region45: #{tpu_custom_call.1} parent=5 // pred_check
        _
      $region46: #{tpu_custom_call.1} parent=5 // pred_check_branch
        %374 = sbr.rel (%p371) target = $region48
      $region47: #{tpu_custom_call.1} parent=5 // pred_region
        %s375 = ssub.s32 %s23, 1
        %s376 = sand.u32 %s50, 1
        %s377 = scalar_lea.sflag [#allocation5], %s376
        %s378 = sand.u32 %s50, 1
        %s379 = smul.addr %s378, 64
        %s380 = scalar_lea.vmem [#allocation4], %s379
        // Predicated region
        $region49: #{tpu_custom_call.1} parent=47 // pred_check
          %p381 = pneg %p63
        $region50: #{tpu_custom_call.1} parent=47 // pred_check_branch
          %383 = sbr.rel (%p381) target = $region52
        $region51: #{tpu_custom_call.1} parent=47 // pred_region
          %384 = dma.done %s377, 1024
        $region52: #{tpu_custom_call.1} parent=47 // pred_fallthru
          _
        %s385 = sand.u32 %s28, 1
        %s386 = scalar_lea.sflag [#allocation8], %s385
        %s387 = sand.u32 %s86, 1
        %s388 = smul.addr %s387, 8
        %s389 = scalar_lea.vmem [#allocation7], %s388
        // Predicated region
        $region53: #{tpu_custom_call.1} parent=47 // pred_check
          %p390 = pneg %p99
        $region54: #{tpu_custom_call.1} parent=47 // pred_check_branch
          %392 = sbr.rel (%p390) target = $region56
        $region55: #{tpu_custom_call.1} parent=47 // pred_region
          %393 = dma.done %s386, 128
        $region56: #{tpu_custom_call.1} parent=47 // pred_fallthru
          _
        %s394 = sand.u32 %s28, 1
        %s395 = scalar_lea.sflag [#allocation8], %s394
        %s396 = sand.u32 %s122, 1
        %s397 = smul.addr %s396, 8
        %s398 = scalar_lea.vmem [#allocation9], %s397
        // Predicated region
        $region57: #{tpu_custom_call.1} parent=47 // pred_check
          %p399 = pneg %p135
        $region58: #{tpu_custom_call.1} parent=47 // pred_check_branch
          %401 = sbr.rel (%p399) target = $region60
        $region59: #{tpu_custom_call.1} parent=47 // pred_region
          %402 = dma.done %s395, 128
        $region60: #{tpu_custom_call.1} parent=47 // pred_fallthru
          _
        // Predicated region
        $region61: #{tpu_custom_call.1} parent=47 // pred_check
          %p403 = pneg %p156
        $region62: #{tpu_custom_call.1} parent=47 // pred_check_branch
          %405 = sbr.rel (%p403) target = $region64
        $region63: #{tpu_custom_call.1} parent=47 // pred_region
          %406 = dma.done [#allocation11], 3072
        $region64: #{tpu_custom_call.1} parent=47 // pred_fallthru
          _
        // Predicated region
        $region65: #{tpu_custom_call.1} parent=47 // pred_check
          %p407 = pneg %p198
        $region66: #{tpu_custom_call.1} parent=47 // pred_check_branch
          %409 = sbr.rel (%p407) target = $region68
        $region67: #{tpu_custom_call.1} parent=47 // pred_region
          %410 = dma.done [#allocation11], 3072
        $region68: #{tpu_custom_call.1} parent=47 // pred_fallthru
          _
        %s411 = sand.u32 %s50, 1
        %s412 = scalar_lea.sflag [#allocation5], %s411
        %s413 = sand.u32 %s50, 1
        %s414 = smul.addr %s413, 64
        %s415 = scalar_lea.vmem [#allocation4], %s414
        %p416 = pneg %p63
        %p417 = pneg %p60
        %s418 = sand.u32 %s28, 1
        %s419 = scalar_lea.sflag [#allocation8], %s418
        %s420 = sand.u32 %s86, 1
        %s421 = smul.addr %s420, 8
        %s422 = scalar_lea.vmem [#allocation7], %s421
        %p423 = pneg %p99
        %p424 = pneg %p96
        %s425 = sand.u32 %s28, 1
        %s426 = scalar_lea.sflag [#allocation8], %s425
        %s427 = sand.u32 %s122, 1
        %s428 = smul.addr %s427, 8
        %s429 = scalar_lea.vmem [#allocation9], %s428
        %p430 = pneg %p135
        %p431 = pneg %p132
        %p432 = pneg %p156
        %p433 = pneg %p153
        %p434 = pneg %p177
        %p435 = pneg %p174
        %p436 = pneg %p198
        %p437 = pneg %p195
        %p438 = pneg %p219
        %p439 = pneg %p216
        %p440 = pneg %p247
        %p441 = pneg %p244
        %s442 = sand.u32 %s234, 1
        %s443 = scalar_lea.sflag [#allocation6], %s442
        %s444 = sand.u32 %s234, 1
        %s445 = smul.addr %s444, 64
        %s446 = scalar_lea.vmem [#allocation13], %s445
        %s447 = smul.u32 8, %s33
        %s448 = smul.u32 %s33, 8
        %s449 = ssub.s32 %s448, 1
        %p450 = scmp.gt.s32.totalorder %s449, 0
        %s451 = scalar_select %p450, %s449, 0
        %s452 = smul.u32 %s33, 8
        %s453 = sadd.s32 %s452, 8
        %p454 = scmp.lt.s32.totalorder %s453, 31
        %s455 = scalar_select %p454, %s453, 31
        %s456 = smul.u32 8, %s33
        %v458 = vld [vmem:[%s380] sm:$0xff]
        %v459 = vld [vmem:[%s380 + $0x8] sm:$0xff]
        %v460 = vld [vmem:[%s380 + $0x10] sm:$0xff]
        %v461 = vld [vmem:[%s380 + $0x18] sm:$0xff]
        %v462 = vld [vmem:[%s380 + $0x20] sm:$0xff]
        %v463 = vld [vmem:[%s380 + $0x28] sm:$0xff]
        %v464 = vld [vmem:[%s380 + $0x30] sm:$0xff]
        %v465 = vld [vmem:[%s380 + $0x38] sm:$0xff]
        %v466 = vpack.c.bf16 %v459, %v458
        %v467 = vpack.c.bf16 %v461, %v460
        %v468 = vpack.c.bf16 %v463, %v462
        %v469 = vpack.c.bf16 %v465, %v464
        %vm474 = vcmask 1043456
        %v475 = vrot.slane %v466, 4
        %v476 = vrot.slane %v467, 4
        %v477 = vsel %vm474, %v475, %v476
        %v478 = vrot.slane %v468, 4
        %v479 = vsel %vm474, %v476, %v478
        %v480 = vrot.slane %v469, 4
        %v481 = vsel %vm474, %v478, %v480
        %487 = vst [vmem:[#allocation2] sm:$0xf0] %v475
        %488 = vst [vmem:[#allocation2 + $0x8] sm:$0xff] %v477
        %489 = vst [vmem:[#allocation2 + $0x10] sm:$0xff] %v479
        %490 = vst [vmem:[#allocation2 + $0x18] sm:$0xff] %v481
        %491 = vst [vmem:[#allocation2 + $0x20] sm:$0xf] %v480
        %p492 = scmp.eq.s32.totalorder %s33, 0
        // Predicated region
        $region69: #{tpu_custom_call.1} parent=47 // pred_check
          %p493 = pneg %p492
        $region70: #{tpu_custom_call.1} parent=47 // pred_check_branch
          %495 = sbr.rel (%p493) target = $region72
        $region71: #{tpu_custom_call.1} parent=47 // pred_region
          %496 = vst [vmem:[#allocation2] sm:$0x8] 0
        $region72: #{tpu_custom_call.1} parent=47 // pred_fallthru
          _
        %p497 = scmp.gt.s32.totalorder %s33, 0
        // Predicated region
        $region73: #{tpu_custom_call.1} parent=47 // pred_check
          %p498 = pneg %p497
        $region74: #{tpu_custom_call.1} parent=47 // pred_check_branch
          %500 = sbr.rel (%p498) target = $region76
        $region75: #{tpu_custom_call.1} parent=47 // pred_region
          %v501 = vld [vmem:[%s389 + $0x6] sm:$0x3]
          %v502 = vpack.c.bf16 %v501, %v501
          %v504 = vrot.slane %v502, 5
          %506 = vst [vmem:[#allocation2] sm:$0x8] %v504
        $region76: #{tpu_custom_call.1} parent=47 // pred_fallthru
          _
        %p507 = scmp.eq.s32.totalorder %s33, 3
        // Predicated region
        $region77: #{tpu_custom_call.1} parent=47 // pred_check
          %p508 = pneg %p507
        $region78: #{tpu_custom_call.1} parent=47 // pred_check_branch
          %510 = sbr.rel (%p508) target = $region80
        $region79: #{tpu_custom_call.1} parent=47 // pred_region
          %511 = vst [vmem:[#allocation2 + $0x20] sm:$0x10] 0
        $region80: #{tpu_custom_call.1} parent=47 // pred_fallthru
          _
        %p512 = scmp.lt.s32.totalorder %s33, 3
        // Predicated region
        $region81: #{tpu_custom_call.1} parent=47 // pred_check
          %p513 = pneg %p512
        $region82: #{tpu_custom_call.1} parent=47 // pred_check_branch
          %515 = sbr.rel (%p513) target = $region84
        $region83: #{tpu_custom_call.1} parent=47 // pred_region
          %v516 = vld [vmem:[%s398] sm:$0x3]
          %v517 = vpack.c.bf16 %v516, %v516
          %v519 = vrot.slane %v517, 4
          %521 = vst [vmem:[#allocation2 + $0x20] sm:$0x10] %v519
        $region84: #{tpu_custom_call.1} parent=47 // pred_fallthru
          _
        %v522 = vld [vmem:[#allocation2] sm:$0xf8]
        %v523 = vld [vmem:[#allocation2 + $0x8] sm:$0xff]
        %v524 = vld [vmem:[#allocation2 + $0x10] sm:$0xff]
        %v525 = vld [vmem:[#allocation2 + $0x18] sm:$0xff]
        %v526 = vld [vmem:[#allocation2 + $0x20] sm:$0xf]
        %v527 = vld [vmem:[#allocation10] sm:$0xf]
        %v528 = vld [vmem:[#allocation10 + $0x4] sm:$0xf]
        %v529 = vld [vmem:[#allocation10 + $0x8] sm:$0xf]
        %v530 = vld [vmem:[#allocation10 + $0xc] sm:$0xf]
        %v531 = vld [vmem:[#allocation10 + $0x10] sm:$0xf]
        %v532 = vld [vmem:[#allocation10 + $0x14] sm:$0xf]
        %v533 = vld [vmem:[#allocation10 + $0x18] sm:$0xf]
        %v534 = vld [vmem:[#allocation10 + $0x1c] sm:$0xf]
        %v535 = vld [vmem:[#allocation10 + $0x20] sm:$0xf]
        %v536 = vld [vmem:[#allocation10 + $0x24] sm:$0xf]
        %v537 = vld [vmem:[#allocation10 + $0x28] sm:$0xf]
        %v538 = vld [vmem:[#allocation10 + $0x2c] sm:$0xf]
        %v539 = vld [vmem:[#allocation10 + $0x30] sm:$0xf]
        %v540 = vld [vmem:[#allocation10 + $0x34] sm:$0xf]
        %v541 = vld [vmem:[#allocation10 + $0x38] sm:$0xf]
        %v542 = vld [vmem:[#allocation10 + $0x3c] sm:$0xf]
        %v543 = vld [vmem:[#allocation2 + $0x20] sm:$0x1f]
        %s544 = scalar_lea.vmem [#allocation10], 64
        %v545 = vld [vmem:[%s544] sm:$0xf]
        %v546 = vld [vmem:[%s544 + $0x4] sm:$0xf]
        %v547 = vld [vmem:[%s544 + $0x8] sm:$0xf]
        %v548 = vld [vmem:[%s544 + $0xc] sm:$0xf]
        %v549 = vld [vmem:[%s544 + $0x10] sm:$0xf]
        %v550 = vld [vmem:[%s544 + $0x14] sm:$0xf]
        %v551 = vld [vmem:[%s544 + $0x18] sm:$0xf]
        %v552 = vld [vmem:[%s544 + $0x1c] sm:$0xf]
        %v553 = vld [vmem:[%s544 + $0x20] sm:$0xf]
        %v554 = vld [vmem:[%s544 + $0x24] sm:$0xf]
        %v555 = vld [vmem:[%s544 + $0x28] sm:$0xf]
        %v556 = vld [vmem:[%s544 + $0x2c] sm:$0xf]
        %v557 = vld [vmem:[%s544 + $0x30] sm:$0xf]
        %v558 = vld [vmem:[%s544 + $0x34] sm:$0xf]
        %v559 = vld [vmem:[%s544 + $0x38] sm:$0xf]
        %v560 = vld [vmem:[%s544 + $0x3c] sm:$0xf]
        %vm561 = vsmask.f32 4352
        %v563 = vshrl.u32 %v522, 16
        %v565 = vrot.slane %v563, 3
        %v566 = vshll.u32 %v522, 16
        %v568 = vrot.slane %v566, 4
        %v569 = vor.u32 %v565, %v568
        %v571 = vshrl.u32 %v523, 16
        %v573 = vrot.slane %v571, 3
        %v574 = vshll.u32 %v523, 16
        %v576 = vrot.slane %v574, 4
        %v577 = vor.u32 %v573, %v576
        %v578 = vsel %vm561, %v569, %v577
        %v580 = vshrl.u32 %v524, 16
        %v582 = vrot.slane %v580, 3
        %v583 = vshll.u32 %v524, 16
        %v585 = vrot.slane %v583, 4
        %v586 = vor.u32 %v582, %v585
        %v587 = vsel %vm561, %v577, %v586
        %v589 = vshrl.u32 %v525, 16
        %v591 = vrot.slane %v589, 3
        %v592 = vshll.u32 %v525, 16
        %v594 = vrot.slane %v592, 4
        %v595 = vor.u32 %v591, %v594
        %v596 = vsel %vm561, %v586, %v595
        %v598 = vshrl.u32 %v543, 16
        %v600 = vrot.slane %v598, 3
        %v601 = vshll.u32 %v543, 16
        %v603 = vrot.slane %v601, 4
        %v604 = vor.u32 %v600, %v603
        %v605 = vsel %vm561, %v595, %v604
        %v627 = vunpack.c.l.b16 %v545
        %v628 = vunpack.c.l.b16 %v546
        %v629 = vunpack.c.l.b16 %v547
        %v630 = vunpack.c.l.b16 %v548
        %v631 = vunpack.c.l.b16 %v549
        %v632 = vunpack.c.l.b16 %v550
        %v633 = vunpack.c.l.b16 %v551
        %v634 = vunpack.c.l.b16 %v552
        %v635 = vunpack.c.l.b16 %v553
        %v636 = vunpack.c.l.b16 %v554
        %v637 = vunpack.c.l.b16 %v555
        %v638 = vunpack.c.l.b16 %v556
        %v639 = vunpack.c.l.b16 %v557
        %v640 = vunpack.c.l.b16 %v558
        %v641 = vunpack.c.l.b16 %v559
        %v642 = vunpack.c.l.b16 %v560
        %v643 = vpack.c.b16 %v628, %v627
        %v644 = vpack.c.b16 %v630, %v629
        %v645 = vpack.c.b16 %v632, %v631
        %v646 = vpack.c.b16 %v634, %v633
        %v647 = vpack.c.b16 %v636, %v635
        %v648 = vpack.c.b16 %v638, %v637
        %v649 = vpack.c.b16 %v640, %v639
        %v650 = vpack.c.b16 %v642, %v641
        %659 = vmatprep.subr.bf16.mxu0 0
        %660 = vmatpush1.bf16.msra.mxu0 %v643
        %661 = vmatprep.subr.bf16.mxu0 0
        %662 = vmatpush1.bf16.msra.mxu0 %v644
        %663 = vmatprep.subr.bf16.mxu0 0
        %664 = vmatpush1.bf16.msra.mxu0 %v645
        %665 = vmatprep.subr.bf16.mxu0 0
        %666 = vmatpush1.bf16.msra.mxu0 %v646
        %667 = vmatprep.subr.bf16.mxu0 0
        %668 = vmatpush1.bf16.msra.mxu0 %v647
        %669 = vmatprep.subr.bf16.mxu0 0
        %670 = vmatpush1.bf16.msra.mxu0 %v648
        %671 = vmatprep.subr.bf16.mxu0 0
        %672 = vmatpush1.bf16.msra.mxu0 %v649
        %673 = vmatprep.subr.bf16.mxu0 0
        %674 = vmatpush1.bf16.msra.mxu0 %v650
        %675 = vmatprep.subr.bf16.mxu0 0
        %676 = vmatpush1.bf16.msra.mxu0 0
        %677 = vmatprep.subr.bf16.mxu0 0
        %678 = vmatpush1.bf16.msra.mxu0 0
        %679 = vmatprep.subr.bf16.mxu0 0
        %680 = vmatpush1.bf16.msra.mxu0 0
        %681 = vmatprep.subr.bf16.mxu0 0
        %682 = vmatpush1.bf16.msra.mxu0 0
        %683 = vmatprep.subr.bf16.mxu0 0
        %684 = vmatpush1.bf16.msra.mxu0 0
        %685 = vmatprep.subr.bf16.mxu0 0
        %686 = vmatpush1.bf16.msra.mxu0 0
        %687 = vmatprep.subr.bf16.mxu0 0
        %688 = vmatpush1.bf16.msra.mxu0 0
        %689 = vmatprep.subr.bf16.mxu0 0
        %690 = vmatpush1.bf16.msra.mxu0 0
        %691 = vmatprep.mubr.bf16.mxu0 0
        %692 = vmatmul.mubr.bf16.gmra.mrb[0].mxu0 %v578
        %v693 = vpop.f32.mrb[0].mxu0
        %v694 = vadd.f32 0.0, %v693
        %v695 = vpop.f32.mrb[0].mxu0
        %v696 = vpop.f32.mrb[0].mxu0
        %v697 = vadd.f32 0.0, %v696
        %v698 = vpop.f32.mrb[0].mxu0
        %699 = vmatprep.mubr.bf16.mxu0 0
        %700 = vmatmul.mubr.bf16.gmra.mrb[0].mxu0 %v587
        %v701 = vpop.f32.mrb[0].mxu0
        %v702 = vadd.f32 0.0, %v701
        %v703 = vpop.f32.mrb[0].mxu0
        %v704 = vpop.f32.mrb[0].mxu0
        %v705 = vadd.f32 0.0, %v704
        %v706 = vpop.f32.mrb[0].mxu0
        %707 = vmatprep.mubr.bf16.mxu0 0
        %708 = vmatmul.mubr.bf16.gmra.mrb[0].mxu0 %v596
        %v709 = vpop.f32.mrb[0].mxu0
        %v710 = vadd.f32 0.0, %v709
        %v711 = vpop.f32.mrb[0].mxu0
        %v712 = vpop.f32.mrb[0].mxu0
        %v713 = vadd.f32 0.0, %v712
        %v714 = vpop.f32.mrb[0].mxu0
        %715 = vmatprep.mubr.bf16.mxu0 0
        %716 = vmatmul.mubr.bf16.gmra.mrb[0].mxu0 %v605
        %v717 = vpop.f32.mrb[0].mxu0
        %v718 = vadd.f32 0.0, %v717
        %v719 = vpop.f32.mrb[0].mxu0
        %v720 = vpop.f32.mrb[0].mxu0
        %v721 = vadd.f32 0.0, %v720
        %v722 = vpop.f32.mrb[0].mxu0
        %723 = vmatprep.mubr.bf16.mxu0 0
        %724 = vmatmul.mubr.bf16.gmra.mrb[0].mxu0 %v604
        %v725 = vpop.f32.mrb[0].mxu0
        %v726 = vadd.f32 0.0, %v725
        %v727 = vpop.f32.mrb[0].mxu0
        %v728 = vpop.f32.mrb[0].mxu0
        %v729 = vpop.f32.mrb[0].mxu0
        %730 = vdwg.mxu0
        %vm736 = vcmask 1044480
        %v737 = vrot.slane %v522, 3
        %v738 = vrot.slane %v523, 3
        %v739 = vsel %vm736, %v737, %v738
        %v740 = vrot.slane %v524, 3
        %v741 = vsel %vm736, %v738, %v740
        %v742 = vrot.slane %v525, 3
        %v743 = vsel %vm736, %v740, %v742
        %v744 = vrot.slane %v526, 3
        %v745 = vsel %vm736, %v742, %v744
        %v767 = vunpack.c.l.b16 %v527
        %v768 = vunpack.c.l.b16 %v528
        %v769 = vunpack.c.l.b16 %v529
        %v770 = vunpack.c.l.b16 %v530
        %v771 = vunpack.c.l.b16 %v531
        %v772 = vunpack.c.l.b16 %v532
        %v773 = vunpack.c.l.b16 %v533
        %v774 = vunpack.c.l.b16 %v534
        %v775 = vunpack.c.l.b16 %v535
        %v776 = vunpack.c.l.b16 %v536
        %v777 = vunpack.c.l.b16 %v537
        %v778 = vunpack.c.l.b16 %v538
        %v779 = vunpack.c.l.b16 %v539
        %v780 = vunpack.c.l.b16 %v540
        %v781 = vunpack.c.l.b16 %v541
        %v782 = vunpack.c.l.b16 %v542
        %v783 = vpack.c.b16 %v768, %v767
        %v784 = vpack.c.b16 %v770, %v769
        %v785 = vpack.c.b16 %v772, %v771
        %v786 = vpack.c.b16 %v774, %v773
        %v787 = vpack.c.b16 %v776, %v775
        %v788 = vpack.c.b16 %v778, %v777
        %v789 = vpack.c.b16 %v780, %v779
        %v790 = vpack.c.b16 %v782, %v781
        %799 = vmatprep.subr.bf16.mxu0 0
        %800 = vmatpush1.bf16.msra.mxu0 %v783
        %801 = vmatprep.subr.bf16.mxu0 0
        %802 = vmatpush1.bf16.msra.mxu0 %v784
        %803 = vmatprep.subr.bf16.mxu0 0
        %804 = vmatpush1.bf16.msra.mxu0 %v785
        %805 = vmatprep.subr.bf16.mxu0 0
        %806 = vmatpush1.bf16.msra.mxu0 %v786
        %807 = vmatprep.subr.bf16.mxu0 0
        %808 = vmatpush1.bf16.msra.mxu0 %v787
        %809 = vmatprep.subr.bf16.mxu0 0
        %810 = vmatpush1.bf16.msra.mxu0 %v788
        %811 = vmatprep.subr.bf16.mxu0 0
        %812 = vmatpush1.bf16.msra.mxu0 %v789
        %813 = vmatprep.subr.bf16.mxu0 0
        %814 = vmatpush1.bf16.msra.mxu0 %v790
        %815 = vmatprep.subr.bf16.mxu0 0
        %816 = vmatpush1.bf16.msra.mxu0 0
        %817 = vmatprep.subr.bf16.mxu0 0
        %818 = vmatpush1.bf16.msra.mxu0 0
        %819 = vmatprep.subr.bf16.mxu0 0
        %820 = vmatpush1.bf16.msra.mxu0 0
        %821 = vmatprep.subr.bf16.mxu0 0
        %822 = vmatpush1.bf16.msra.mxu0 0
        %823 = vmatprep.subr.bf16.mxu0 0
        %824 = vmatpush1.bf16.msra.mxu0 0
        %825 = vmatprep.subr.bf16.mxu0 0
        %826 = vmatpush1.bf16.msra.mxu0 0
        %827 = vmatprep.subr.bf16.mxu0 0
        %828 = vmatpush1.bf16.msra.mxu0 0
        %829 = vmatprep.subr.bf16.mxu0 0
        %830 = vmatpush1.bf16.msra.mxu0 0
        %831 = vmatprep.mubr.bf16.mxu0 0
        %832 = vmatmul.mubr.bf16.gmra.mrb[0].mxu0 %v739
        %v833 = vpop.f32.mrb[0].mxu0
        %v834 = vadd.f32 %v694, %v833
        %v835 = vpop.f32.mrb[0].mxu0
        %v836 = vpop.f32.mrb[0].mxu0
        %v837 = vadd.f32 %v697, %v836
        %v838 = vpop.f32.mrb[0].mxu0
        %839 = vmatprep.mubr.bf16.mxu0 0
        %840 = vmatmul.mubr.bf16.gmra.mrb[0].mxu0 %v741
        %v841 = vpop.f32.mrb[0].mxu0
        %v842 = vadd.f32 %v702, %v841
        %v843 = vpop.f32.mrb[0].mxu0
        %v844 = vpop.f32.mrb[0].mxu0
        %v845 = vadd.f32 %v705, %v844
        %v846 = vpop.f32.mrb[0].mxu0
        %847 = vmatprep.mubr.bf16.mxu0 0
        %848 = vmatmul.mubr.bf16.gmra.mrb[0].mxu0 %v743
        %v849 = vpop.f32.mrb[0].mxu0
        %v850 = vadd.f32 %v710, %v849
        %v851 = vpop.f32.mrb[0].mxu0
        %v852 = vpop.f32.mrb[0].mxu0
        %v853 = vadd.f32 %v713, %v852
        %v854 = vpop.f32.mrb[0].mxu0
        %855 = vmatprep.mubr.bf16.mxu0 0
        %856 = vmatmul.mubr.bf16.gmra.mrb[0].mxu0 %v745
        %v857 = vpop.f32.mrb[0].mxu0
        %v858 = vadd.f32 %v718, %v857
        %v859 = vpop.f32.mrb[0].mxu0
        %v860 = vpop.f32.mrb[0].mxu0
        %v861 = vadd.f32 %v721, %v860
        %v862 = vpop.f32.mrb[0].mxu0
        %863 = vmatprep.mubr.bf16.mxu0 0
        %864 = vmatmul.mubr.bf16.gmra.mrb[0].mxu0 %v744
        %v865 = vpop.f32.mrb[0].mxu0
        %v866 = vadd.f32 %v726, %v865
        %v867 = vpop.f32.mrb[0].mxu0
        %v868 = vpop.f32.mrb[0].mxu0
        %v869 = vpop.f32.mrb[0].mxu0
        %870 = vdwg.mxu0
        %v871 = vld [vmem:[#allocation2] sm:$0xf0]
        %s872 = scalar_lea.vmem [#allocation10], 128
        %v873 = vld [vmem:[%s872] sm:$0xf]
        %v874 = vld [vmem:[%s872 + $0x4] sm:$0xf]
        %v875 = vld [vmem:[%s872 + $0x8] sm:$0xf]
        %v876 = vld [vmem:[%s872 + $0xc] sm:$0xf]
        %v877 = vld [vmem:[%s872 + $0x10] sm:$0xf]
        %v878 = vld [vmem:[%s872 + $0x14] sm:$0xf]
        %v879 = vld [vmem:[%s872 + $0x18] sm:$0xf]
        %v880 = vld [vmem:[%s872 + $0x1c] sm:$0xf]
        %v881 = vld [vmem:[%s872 + $0x20] sm:$0xf]
        %v882 = vld [vmem:[%s872 + $0x24] sm:$0xf]
        %v883 = vld [vmem:[%s872 + $0x28] sm:$0xf]
        %v884 = vld [vmem:[%s872 + $0x2c] sm:$0xf]
        %v885 = vld [vmem:[%s872 + $0x30] sm:$0xf]
        %v886 = vld [vmem:[%s872 + $0x34] sm:$0xf]
        %v887 = vld [vmem:[%s872 + $0x38] sm:$0xf]
        %v888 = vld [vmem:[%s872 + $0x3c] sm:$0xf]
        %v891 = vrot.slane %v871, 4
        %v892 = vrot.slane %v523, 4
        %v893 = vsel %vm474, %v891, %v892
        %v894 = vrot.slane %v524, 4
        %v895 = vsel %vm474, %v892, %v894
        %v896 = vrot.slane %v525, 4
        %v897 = vsel %vm474, %v894, %v896
        %v898 = vrot.slane %v543, 4
        %v899 = vsel %vm474, %v896, %v898
        %v921 = vunpack.c.l.b16 %v873
        %v922 = vunpack.c.l.b16 %v874
        %v923 = vunpack.c.l.b16 %v875
        %v924 = vunpack.c.l.b16 %v876
        %v925 = vunpack.c.l.b16 %v877
        %v926 = vunpack.c.l.b16 %v878
        %v927 = vunpack.c.l.b16 %v879
        %v928 = vunpack.c.l.b16 %v880
        %v929 = vunpack.c.l.b16 %v881
        %v930 = vunpack.c.l.b16 %v882
        %v931 = vunpack.c.l.b16 %v883
        %v932 = vunpack.c.l.b16 %v884
        %v933 = vunpack.c.l.b16 %v885
        %v934 = vunpack.c.l.b16 %v886
        %v935 = vunpack.c.l.b16 %v887
        %v936 = vunpack.c.l.b16 %v888
        %v937 = vpack.c.b16 %v922, %v921
        %v938 = vpack.c.b16 %v924, %v923
        %v939 = vpack.c.b16 %v926, %v925
        %v940 = vpack.c.b16 %v928, %v927
        %v941 = vpack.c.b16 %v930, %v929
        %v942 = vpack.c.b16 %v932, %v931
        %v943 = vpack.c.b16 %v934, %v933
        %v944 = vpack.c.b16 %v936, %v935
        %953 = vmatprep.subr.bf16.mxu0 0
        %954 = vmatpush1.bf16.msra.mxu0 %v937
        %955 = vmatprep.subr.bf16.mxu0 0
        %956 = vmatpush1.bf16.msra.mxu0 %v938
        %957 = vmatprep.subr.bf16.mxu0 0
        %958 = vmatpush1.bf16.msra.mxu0 %v939
        %959 = vmatprep.subr.bf16.mxu0 0
        %960 = vmatpush1.bf16.msra.mxu0 %v940
        %961 = vmatprep.subr.bf16.mxu0 0
        %962 = vmatpush1.bf16.msra.mxu0 %v941
        %963 = vmatprep.subr.bf16.mxu0 0
        %964 = vmatpush1.bf16.msra.mxu0 %v942
        %965 = vmatprep.subr.bf16.mxu0 0
        %966 = vmatpush1.bf16.msra.mxu0 %v943
        %967 = vmatprep.subr.bf16.mxu0 0
        %968 = vmatpush1.bf16.msra.mxu0 %v944
        %969 = vmatprep.subr.bf16.mxu0 0
        %970 = vmatpush1.bf16.msra.mxu0 0
        %971 = vmatprep.subr.bf16.mxu0 0
        %972 = vmatpush1.bf16.msra.mxu0 0
        %973 = vmatprep.subr.bf16.mxu0 0
        %974 = vmatpush1.bf16.msra.mxu0 0
        %975 = vmatprep.subr.bf16.mxu0 0
        %976 = vmatpush1.bf16.msra.mxu0 0
        %977 = vmatprep.subr.bf16.mxu0 0
        %978 = vmatpush1.bf16.msra.mxu0 0
        %979 = vmatprep.subr.bf16.mxu0 0
        %980 = vmatpush1.bf16.msra.mxu0 0
        %981 = vmatprep.subr.bf16.mxu0 0
        %982 = vmatpush1.bf16.msra.mxu0 0
        %983 = vmatprep.subr.bf16.mxu0 0
        %984 = vmatpush1.bf16.msra.mxu0 0
        %985 = vmatprep.mubr.bf16.mxu0 0
        %986 = vmatmul.mubr.bf16.gmra.mrb[0].mxu0 %v893
        %v987 = vpop.f32.mrb[0].mxu0
        %v988 = vadd.f32 0.0, %v987
        %v989 = vpop.f32.mrb[0].mxu0
        %v990 = vpop.f32.mrb[0].mxu0
        %v991 = vadd.f32 0.0, %v990
        %v992 = vpop.f32.mrb[0].mxu0
        %993 = vmatprep.mubr.bf16.mxu0 0
        %994 = vmatmul.mubr.bf16.gmra.mrb[0].mxu0 %v895
        %v995 = vpop.f32.mrb[0].mxu0
        %v996 = vadd.f32 0.0, %v995
        %v997 = vpop.f32.mrb[0].mxu0
        %v998 = vpop.f32.mrb[0].mxu0
        %v999 = vadd.f32 0.0, %v998
        %v1000 = vpop.f32.mrb[0].mxu0
        %1001 = vmatprep.mubr.bf16.mxu0 0
        %1002 = vmatmul.mubr.bf16.gmra.mrb[0].mxu0 %v897
        %v1003 = vpop.f32.mrb[0].mxu0
        %v1004 = vadd.f32 0.0, %v1003
        %v1005 = vpop.f32.mrb[0].mxu0
        %v1006 = vpop.f32.mrb[0].mxu0
        %v1007 = vadd.f32 0.0, %v1006
        %v1008 = vpop.f32.mrb[0].mxu0
        %1009 = vmatprep.mubr.bf16.mxu0 0
        %1010 = vmatmul.mubr.bf16.gmra.mrb[0].mxu0 %v899
        %v1011 = vpop.f32.mrb[0].mxu0
        %v1012 = vadd.f32 0.0, %v1011
        %v1013 = vpop.f32.mrb[0].mxu0
        %v1014 = vpop.f32.mrb[0].mxu0
        %v1015 = vadd.f32 0.0, %v1014
        %v1016 = vpop.f32.mrb[0].mxu0
        %1017 = vmatprep.mubr.bf16.mxu0 0
        %1018 = vmatmul.mubr.bf16.gmra.mrb[0].mxu0 %v898
        %v1019 = vpop.f32.mrb[0].mxu0
        %v1020 = vadd.f32 0.0, %v1019
        %v1021 = vpop.f32.mrb[0].mxu0
        %v1022 = vpop.f32.mrb[0].mxu0
        %v1023 = vpop.f32.mrb[0].mxu0
        %1024 = vdwg.mxu0
        %v1025 = vadd.f32 %v834, %v988
        %v1026 = vadd.f32 %v837, %v991
        %v1027 = vadd.f32 %v842, %v996
        %v1028 = vadd.f32 %v845, %v999
        %v1029 = vadd.f32 %v850, %v1004
        %v1030 = vadd.f32 %v853, %v1007
        %v1031 = vadd.f32 %v858, %v1012
        %v1032 = vadd.f32 %v861, %v1015
        %v1033 = vadd.f32 %v866, %v1020
        %v1034 = vld [vmem:[%s4] sm:$0x1]
        %v1036 = vlaneseq
        %v1037 = vshrl.u32 %v1036, 7
        %v1038 = vsub.s32 0, %v1037
        %v1039 = vrot.slane %v1034, %v1038
        %v1041 = vadd.f32 %v1025, %v1039
        %v1042 = vadd.f32 %v1026, %v1039
        %v1043 = vadd.f32 %v1027, %v1039
        %v1044 = vadd.f32 %v1028, %v1039
        %v1045 = vadd.f32 %v1029, %v1039
        %v1046 = vadd.f32 %v1030, %v1039
        %v1047 = vadd.f32 %v1031, %v1039
        %v1048 = vadd.f32 %v1032, %v1039
        %v1049 = vadd.f32 %v1033, %v1039
        %vm1050 = vcmp.ge.f32.partialorder %v1041, 0.0
        %vm1051 = vcmp.ge.f32.partialorder %v1042, 0.0
        %vm1052 = vcmp.ge.f32.partialorder %v1043, 0.0
        %vm1053 = vcmp.ge.f32.partialorder %v1044, 0.0
        %vm1054 = vcmp.ge.f32.partialorder %v1045, 0.0
        %vm1055 = vcmp.ge.f32.partialorder %v1046, 0.0
        %vm1056 = vcmp.ge.f32.partialorder %v1047, 0.0
        %vm1057 = vcmp.ge.f32.partialorder %v1048, 0.0
        %vm1058 = vcmp.ge.f32.partialorder %v1049, 0.0
        %v1059 = vmul.f32 %v1041, 0.1
        %v1060 = vmul.f32 %v1042, 0.1
        %v1061 = vmul.f32 %v1043, 0.1
        %v1062 = vmul.f32 %v1044, 0.1
        %v1063 = vmul.f32 %v1045, 0.1
        %v1064 = vmul.f32 %v1046, 0.1
        %v1065 = vmul.f32 %v1047, 0.1
        %v1066 = vmul.f32 %v1048, 0.1
        %v1067 = vmul.f32 %v1049, 0.1
        %v1068 = vsel %vm1050, %v1041, %v1059
        %v1069 = vsel %vm1051, %v1042, %v1060
        %v1070 = vsel %vm1052, %v1043, %v1061
        %v1071 = vsel %vm1053, %v1044, %v1062
        %v1072 = vsel %vm1054, %v1045, %v1063
        %v1073 = vsel %vm1055, %v1046, %v1064
        %v1074 = vsel %vm1056, %v1047, %v1065
        %v1075 = vsel %vm1057, %v1048, %v1066
        %v1076 = vsel %vm1058, %v1049, %v1067
        %v1077 = vpack.c.bf16 %v1069, %v1068
        %v1078 = vpack.c.bf16 %v1071, %v1070
        %v1079 = vpack.c.bf16 %v1073, %v1072
        %v1080 = vpack.c.bf16 %v1075, %v1074
        %v1081 = vpack.c.bf16 %v1076, %v1076
        %v1087 = vunpack.c.l.b16 %v1077
        %v1088 = vunpack.c.h.b16 %v1077
        %v1089 = vunpack.c.l.b16 %v1078
        %v1090 = vunpack.c.h.b16 %v1078
        %v1091 = vunpack.c.l.b16 %v1079
        %v1092 = vunpack.c.h.b16 %v1079
        %v1093 = vunpack.c.l.b16 %v1080
        %v1094 = vunpack.c.h.b16 %v1080
        %v1095 = vunpack.c.l.b16 %v1081
        %v1096 = vpack.c.b16 %v1087, %v1087
        %v1097 = vpack.c.b16 %v1088, %v1088
        %v1098 = vpack.c.b16 %v1089, %v1089
        %v1099 = vpack.c.b16 %v1090, %v1090
        %v1100 = vpack.c.b16 %v1091, %v1091
        %v1101 = vpack.c.b16 %v1092, %v1092
        %v1102 = vpack.c.b16 %v1093, %v1093
        %v1103 = vpack.c.b16 %v1094, %v1094
        %v1104 = vpack.c.b16 %v1095, %v1095
        %1114 = vst [vmem:[#allocation3] sm:$0xf] %v1096
        %1115 = vst [vmem:[#allocation3 + $0x4] sm:$0xf] %v1097
        %1116 = vst [vmem:[#allocation3 + $0x8] sm:$0xf] %v1098
        %1117 = vst [vmem:[#allocation3 + $0xc] sm:$0xf] %v1099
        %1118 = vst [vmem:[#allocation3 + $0x10] sm:$0xf] %v1100
        %1119 = vst [vmem:[#allocation3 + $0x14] sm:$0xf] %v1101
        %1120 = vst [vmem:[#allocation3 + $0x18] sm:$0xf] %v1102
        %1121 = vst [vmem:[#allocation3 + $0x1c] sm:$0xf] %v1103
        %1122 = vst [vmem:[#allocation3 + $0x20] sm:$0x1] %v1104
        // Predicated region
        $region85: #{tpu_custom_call.1} parent=47 // pred_check
          %p1123 = pneg %p492
        $region86: #{tpu_custom_call.1} parent=47 // pred_check_branch
          %1125 = sbr.rel (%p1123) target = $region88
        $region87: #{tpu_custom_call.1} parent=47 // pred_region
          %vm1126 = vcmask 1040384
          %vm1127 = vsmask.f32 256
          %vm1128 = vmand %vm1126, %vm1127
          %v1129 = vld [vmem:[#allocation3] sm:$0x1]
          %v1130 = vsel %vm1128, 0, %v1129
          %1131 = vst [vmem:[#allocation3] sm:$0x1] %v1130
        $region88: #{tpu_custom_call.1} parent=47 // pred_fallthru
          _
        // Predicated region
        $region89: #{tpu_custom_call.1} parent=47 // pred_check
          %p1132 = pneg %p507
        $region90: #{tpu_custom_call.1} parent=47 // pred_check_branch
          %1134 = sbr.rel (%p1132) target = $region92
        $region91: #{tpu_custom_call.1} parent=47 // pred_region
          %vm1135 = vcmask 1040384
          %vm1136 = vsmask.f32 7938
          %vm1137 = vmand %vm1135, %vm1136
          %v1138 = vld [vmem:[#allocation3 + $0x20] sm:$0x1]
          %v1139 = vsel %vm1137, 0, %v1138
          %1140 = vst [vmem:[#allocation3 + $0x20] sm:$0x1] %v1139
        $region92: #{tpu_custom_call.1} parent=47 // pred_fallthru
          _
        %v1141 = vld [vmem:[#allocation3] sm:$0xf]
        %v1142 = vld [vmem:[#allocation3 + $0x4] sm:$0xf]
        %v1143 = vld [vmem:[#allocation3 + $0x8] sm:$0xf]
        %v1144 = vld [vmem:[#allocation3 + $0xc] sm:$0xf]
        %v1145 = vld [vmem:[#allocation3 + $0x10] sm:$0xf]
        %v1146 = vld [vmem:[#allocation3 + $0x14] sm:$0xf]
        %v1147 = vld [vmem:[#allocation3 + $0x18] sm:$0xf]
        %v1148 = vld [vmem:[#allocation3 + $0x1c] sm:$0xf]
        %v1149 = vld [vmem:[#allocation12] sm:$0xf]
        %v1150 = vld [vmem:[#allocation12 + $0x4] sm:$0xf]
        %v1151 = vld [vmem:[#allocation12 + $0x8] sm:$0xf]
        %v1152 = vld [vmem:[#allocation12 + $0xc] sm:$0xf]
        %v1153 = vld [vmem:[#allocation12 + $0x10] sm:$0xf]
        %v1154 = vld [vmem:[#allocation12 + $0x14] sm:$0xf]
        %v1155 = vld [vmem:[#allocation12 + $0x18] sm:$0xf]
        %v1156 = vld [vmem:[#allocation12 + $0x1c] sm:$0xf]
        %v1157 = vld [vmem:[#allocation12 + $0x20] sm:$0xf]
        %v1158 = vld [vmem:[#allocation12 + $0x24] sm:$0xf]
        %v1159 = vld [vmem:[#allocation12 + $0x28] sm:$0xf]
        %v1160 = vld [vmem:[#allocation12 + $0x2c] sm:$0xf]
        %v1161 = vld [vmem:[#allocation12 + $0x30] sm:$0xf]
        %v1162 = vld [vmem:[#allocation12 + $0x34] sm:$0xf]
        %v1163 = vld [vmem:[#allocation12 + $0x38] sm:$0xf]
        %v1164 = vld [vmem:[#allocation12 + $0x3c] sm:$0xf]
        %v1165 = vld [vmem:[#allocation3 + $0x20] sm:$0x1]
        %s1166 = scalar_lea.vmem [#allocation12], 64
        %v1167 = vld [vmem:[%s1166] sm:$0xf]
        %v1168 = vld [vmem:[%s1166 + $0x4] sm:$0xf]
        %v1169 = vld [vmem:[%s1166 + $0x8] sm:$0xf]
        %v1170 = vld [vmem:[%s1166 + $0xc] sm:$0xf]
        %v1171 = vld [vmem:[%s1166 + $0x10] sm:$0xf]
        %v1172 = vld [vmem:[%s1166 + $0x14] sm:$0xf]
        %v1173 = vld [vmem:[%s1166 + $0x18] sm:$0xf]
        %v1174 = vld [vmem:[%s1166 + $0x1c] sm:$0xf]
        %v1175 = vld [vmem:[%s1166 + $0x20] sm:$0xf]
        %v1176 = vld [vmem:[%s1166 + $0x24] sm:$0xf]
        %v1177 = vld [vmem:[%s1166 + $0x28] sm:$0xf]
        %v1178 = vld [vmem:[%s1166 + $0x2c] sm:$0xf]
        %v1179 = vld [vmem:[%s1166 + $0x30] sm:$0xf]
        %v1180 = vld [vmem:[%s1166 + $0x34] sm:$0xf]
        %v1181 = vld [vmem:[%s1166 + $0x38] sm:$0xf]
        %v1182 = vld [vmem:[%s1166 + $0x3c] sm:$0xf]
        %v1192 = vunpack.c.l.b16 %v1141
        %v1193 = vunpack.c.l.b16 %v1142
        %v1194 = vunpack.c.l.b16 %v1143
        %v1195 = vunpack.c.l.b16 %v1144
        %v1196 = vunpack.c.l.b16 %v1145
        %v1197 = vunpack.c.l.b16 %v1146
        %v1198 = vunpack.c.l.b16 %v1147
        %v1199 = vunpack.c.l.b16 %v1148
        %v1200 = vunpack.c.l.b16 %v1165
        %v1201 = vpack.c.b16 %v1193, %v1192
        %v1202 = vpack.c.b16 %v1195, %v1194
        %v1203 = vpack.c.b16 %v1197, %v1196
        %v1204 = vpack.c.b16 %v1199, %v1198
        %v1205 = vpack.c.b16 %v1200, %v1200
        %vm1206 = vsmask.f32 7424
        %v1208 = vshrl.u32 %v1201, 16
        %v1210 = vshll.u32 %v1201, 16
        %v1212 = vrot.slane %v1210, 1
        %v1213 = vor.u32 %v1208, %v1212
        %v1215 = vshll.u32 %v1202, 16
        %v1217 = vrot.slane %v1215, 1
        %v1218 = vsel %vm1206, %v1213, %v1217
        %v1219 = vshrl.u32 %v1202, 16
        %v1221 = vor.u32 %v1219, %v1217
        %v1223 = vshll.u32 %v1203, 16
        %v1225 = vrot.slane %v1223, 1
        %v1226 = vsel %vm1206, %v1221, %v1225
        %v1227 = vshrl.u32 %v1203, 16
        %v1229 = vor.u32 %v1227, %v1225
        %v1231 = vshll.u32 %v1204, 16
        %v1233 = vrot.slane %v1231, 1
        %v1234 = vsel %vm1206, %v1229, %v1233
        %v1235 = vshrl.u32 %v1204, 16
        %v1237 = vor.u32 %v1235, %v1233
        %v1239 = vshll.u32 %v1205, 16
        %v1241 = vrot.slane %v1239, 1
        %v1242 = vsel %vm1206, %v1237, %v1241
        %v1263 = vunpack.c.l.b16 %v1167
        %v1264 = vunpack.c.l.b16 %v1168
        %v1265 = vunpack.c.l.b16 %v1169
        %v1266 = vunpack.c.l.b16 %v1170
        %v1267 = vunpack.c.l.b16 %v1171
        %v1268 = vunpack.c.l.b16 %v1172
        %v1269 = vunpack.c.l.b16 %v1173
        %v1270 = vunpack.c.l.b16 %v1174
        %v1271 = vunpack.c.l.b16 %v1175
        %v1272 = vunpack.c.l.b16 %v1176
        %v1273 = vunpack.c.l.b16 %v1177
        %v1274 = vunpack.c.l.b16 %v1178
        %v1275 = vunpack.c.l.b16 %v1179
        %v1276 = vunpack.c.l.b16 %v1180
        %v1277 = vunpack.c.l.b16 %v1181
        %v1278 = vunpack.c.l.b16 %v1182
        %v1279 = vpack.c.b16 %v1264, %v1263
        %v1280 = vpack.c.b16 %v1266, %v1265
        %v1281 = vpack.c.b16 %v1268, %v1267
        %v1282 = vpack.c.b16 %v1270, %v1269
        %v1283 = vpack.c.b16 %v1272, %v1271
        %v1284 = vpack.c.b16 %v1274, %v1273
        %v1285 = vpack.c.b16 %v1276, %v1275
        %v1286 = vpack.c.b16 %v1278, %v1277
        %1295 = vmatprep.subr.bf16.mxu0 0
        %1296 = vmatpush1.bf16.msra.mxu0 %v1279
        %1297 = vmatprep.subr.bf16.mxu0 0
        %1298 = vmatpush1.bf16.msra.mxu0 %v1280
        %1299 = vmatprep.subr.bf16.mxu0 0
        %1300 = vmatpush1.bf16.msra.mxu0 %v1281
        %1301 = vmatprep.subr.bf16.mxu0 0
        %1302 = vmatpush1.bf16.msra.mxu0 %v1282
        %1303 = vmatprep.subr.bf16.mxu0 0
        %1304 = vmatpush1.bf16.msra.mxu0 %v1283
        %1305 = vmatprep.subr.bf16.mxu0 0
        %1306 = vmatpush1.bf16.msra.mxu0 %v1284
        %1307 = vmatprep.subr.bf16.mxu0 0
        %1308 = vmatpush1.bf16.msra.mxu0 %v1285
        %1309 = vmatprep.subr.bf16.mxu0 0
        %1310 = vmatpush1.bf16.msra.mxu0 %v1286
        %1311 = vmatprep.subr.bf16.mxu0 0
        %1312 = vmatpush1.bf16.msra.mxu0 0
        %1313 = vmatprep.subr.bf16.mxu0 0
        %1314 = vmatpush1.bf16.msra.mxu0 0
        %1315 = vmatprep.subr.bf16.mxu0 0
        %1316 = vmatpush1.bf16.msra.mxu0 0
        %1317 = vmatprep.subr.bf16.mxu0 0
        %1318 = vmatpush1.bf16.msra.mxu0 0
        %1319 = vmatprep.subr.bf16.mxu0 0
        %1320 = vmatpush1.bf16.msra.mxu0 0
        %1321 = vmatprep.subr.bf16.mxu0 0
        %1322 = vmatpush1.bf16.msra.mxu0 0
        %1323 = vmatprep.subr.bf16.mxu0 0
        %1324 = vmatpush1.bf16.msra.mxu0 0
        %1325 = vmatprep.subr.bf16.mxu0 0
        %1326 = vmatpush1.bf16.msra.mxu0 0
        %1327 = vmatprep.mubr.bf16.mxu0 0
        %1328 = vmatmul.mubr.bf16.gmra.mrb[0].mxu0 %v1218
        %v1329 = vpop.f32.mrb[0].mxu0
        %v1330 = vadd.f32 0.0, %v1329
        %v1331 = vpop.f32.mrb[0].mxu0
        %v1332 = vpop.f32.mrb[0].mxu0
        %v1333 = vadd.f32 0.0, %v1332
        %v1334 = vpop.f32.mrb[0].mxu0
        %1335 = vmatprep.mubr.bf16.mxu0 0
        %1336 = vmatmul.mubr.bf16.gmra.mrb[0].mxu0 %v1226
        %v1337 = vpop.f32.mrb[0].mxu0
        %v1338 = vadd.f32 0.0, %v1337
        %v1339 = vpop.f32.mrb[0].mxu0
        %v1340 = vpop.f32.mrb[0].mxu0
        %v1341 = vadd.f32 0.0, %v1340
        %v1342 = vpop.f32.mrb[0].mxu0
        %1343 = vmatprep.mubr.bf16.mxu0 0
        %1344 = vmatmul.mubr.bf16.gmra.mrb[0].mxu0 %v1234
        %v1345 = vpop.f32.mrb[0].mxu0
        %v1346 = vadd.f32 0.0, %v1345
        %v1347 = vpop.f32.mrb[0].mxu0
        %v1348 = vpop.f32.mrb[0].mxu0
        %v1349 = vadd.f32 0.0, %v1348
        %v1350 = vpop.f32.mrb[0].mxu0
        %1351 = vmatprep.mubr.bf16.mxu0 0
        %1352 = vmatmul.mubr.bf16.gmra.mrb[0].mxu0 %v1242
        %v1353 = vpop.f32.mrb[0].mxu0
        %v1354 = vadd.f32 0.0, %v1353
        %v1355 = vpop.f32.mrb[0].mxu0
        %v1356 = vpop.f32.mrb[0].mxu0
        %v1357 = vadd.f32 0.0, %v1356
        %v1358 = vpop.f32.mrb[0].mxu0
        %1359 = vdwg.mxu0
        %v1380 = vunpack.c.l.b16 %v1149
        %v1381 = vunpack.c.l.b16 %v1150
        %v1382 = vunpack.c.l.b16 %v1151
        %v1383 = vunpack.c.l.b16 %v1152
        %v1384 = vunpack.c.l.b16 %v1153
        %v1385 = vunpack.c.l.b16 %v1154
        %v1386 = vunpack.c.l.b16 %v1155
        %v1387 = vunpack.c.l.b16 %v1156
        %v1388 = vunpack.c.l.b16 %v1157
        %v1389 = vunpack.c.l.b16 %v1158
        %v1390 = vunpack.c.l.b16 %v1159
        %v1391 = vunpack.c.l.b16 %v1160
        %v1392 = vunpack.c.l.b16 %v1161
        %v1393 = vunpack.c.l.b16 %v1162
        %v1394 = vunpack.c.l.b16 %v1163
        %v1395 = vunpack.c.l.b16 %v1164
        %v1396 = vpack.c.b16 %v1381, %v1380
        %v1397 = vpack.c.b16 %v1383, %v1382
        %v1398 = vpack.c.b16 %v1385, %v1384
        %v1399 = vpack.c.b16 %v1387, %v1386
        %v1400 = vpack.c.b16 %v1389, %v1388
        %v1401 = vpack.c.b16 %v1391, %v1390
        %v1402 = vpack.c.b16 %v1393, %v1392
        %v1403 = vpack.c.b16 %v1395, %v1394
        %1412 = vmatprep.subr.bf16.mxu0 0
        %1413 = vmatpush1.bf16.msra.mxu0 %v1396
        %1414 = vmatprep.subr.bf16.mxu0 0
        %1415 = vmatpush1.bf16.msra.mxu0 %v1397
        %1416 = vmatprep.subr.bf16.mxu0 0
        %1417 = vmatpush1.bf16.msra.mxu0 %v1398
        %1418 = vmatprep.subr.bf16.mxu0 0
        %1419 = vmatpush1.bf16.msra.mxu0 %v1399
        %1420 = vmatprep.subr.bf16.mxu0 0
        %1421 = vmatpush1.bf16.msra.mxu0 %v1400
        %1422 = vmatprep.subr.bf16.mxu0 0
        %1423 = vmatpush1.bf16.msra.mxu0 %v1401
        %1424 = vmatprep.subr.bf16.mxu0 0
        %1425 = vmatpush1.bf16.msra.mxu0 %v1402
        %1426 = vmatprep.subr.bf16.mxu0 0
        %1427 = vmatpush1.bf16.msra.mxu0 %v1403
        %1428 = vmatprep.subr.bf16.mxu0 0
        %1429 = vmatpush1.bf16.msra.mxu0 0
        %1430 = vmatprep.subr.bf16.mxu0 0
        %1431 = vmatpush1.bf16.msra.mxu0 0
        %1432 = vmatprep.subr.bf16.mxu0 0
        %1433 = vmatpush1.bf16.msra.mxu0 0
        %1434 = vmatprep.subr.bf16.mxu0 0
        %1435 = vmatpush1.bf16.msra.mxu0 0
        %1436 = vmatprep.subr.bf16.mxu0 0
        %1437 = vmatpush1.bf16.msra.mxu0 0
        %1438 = vmatprep.subr.bf16.mxu0 0
        %1439 = vmatpush1.bf16.msra.mxu0 0
        %1440 = vmatprep.subr.bf16.mxu0 0
        %1441 = vmatpush1.bf16.msra.mxu0 0
        %1442 = vmatprep.subr.bf16.mxu0 0
        %1443 = vmatpush1.bf16.msra.mxu0 0
        %1444 = vmatprep.mubr.bf16.mxu0 0
        %1445 = vmatmul.mubr.bf16.gmra.mrb[0].mxu0 %v1201
        %v1446 = vpop.f32.mrb[0].mxu0
        %v1447 = vadd.f32 %v1330, %v1446
        %v1448 = vpop.f32.mrb[0].mxu0
        %v1449 = vpop.f32.mrb[0].mxu0
        %v1450 = vadd.f32 %v1333, %v1449
        %v1451 = vpop.f32.mrb[0].mxu0
        %1452 = vmatprep.mubr.bf16.mxu0 0
        %1453 = vmatmul.mubr.bf16.gmra.mrb[0].mxu0 %v1202
        %v1454 = vpop.f32.mrb[0].mxu0
        %v1455 = vadd.f32 %v1338, %v1454
        %v1456 = vpop.f32.mrb[0].mxu0
        %v1457 = vpop.f32.mrb[0].mxu0
        %v1458 = vadd.f32 %v1341, %v1457
        %v1459 = vpop.f32.mrb[0].mxu0
        %1460 = vmatprep.mubr.bf16.mxu0 0
        %1461 = vmatmul.mubr.bf16.gmra.mrb[0].mxu0 %v1203
        %v1462 = vpop.f32.mrb[0].mxu0
        %v1463 = vadd.f32 %v1346, %v1462
        %v1464 = vpop.f32.mrb[0].mxu0
        %v1465 = vpop.f32.mrb[0].mxu0
        %v1466 = vadd.f32 %v1349, %v1465
        %v1467 = vpop.f32.mrb[0].mxu0
        %1468 = vmatprep.mubr.bf16.mxu0 0
        %1469 = vmatmul.mubr.bf16.gmra.mrb[0].mxu0 %v1204
        %v1470 = vpop.f32.mrb[0].mxu0
        %v1471 = vadd.f32 %v1354, %v1470
        %v1472 = vpop.f32.mrb[0].mxu0
        %v1473 = vpop.f32.mrb[0].mxu0
        %v1474 = vadd.f32 %v1357, %v1473
        %v1475 = vpop.f32.mrb[0].mxu0
        %1476 = vdwg.mxu0
        %v1477 = vld [vmem:[#allocation3] sm:$0xe]
        %s1478 = scalar_lea.vmem [#allocation12], 128
        %v1479 = vld [vmem:[%s1478] sm:$0xf]
        %v1480 = vld [vmem:[%s1478 + $0x4] sm:$0xf]
        %v1481 = vld [vmem:[%s1478 + $0x8] sm:$0xf]
        %v1482 = vld [vmem:[%s1478 + $0xc] sm:$0xf]
        %v1483 = vld [vmem:[%s1478 + $0x10] sm:$0xf]
        %v1484 = vld [vmem:[%s1478 + $0x14] sm:$0xf]
        %v1485 = vld [vmem:[%s1478 + $0x18] sm:$0xf]
        %v1486 = vld [vmem:[%s1478 + $0x1c] sm:$0xf]
        %v1487 = vld [vmem:[%s1478 + $0x20] sm:$0xf]
        %v1488 = vld [vmem:[%s1478 + $0x24] sm:$0xf]
        %v1489 = vld [vmem:[%s1478 + $0x28] sm:$0xf]
        %v1490 = vld [vmem:[%s1478 + $0x2c] sm:$0xf]
        %v1491 = vld [vmem:[%s1478 + $0x30] sm:$0xf]
        %v1492 = vld [vmem:[%s1478 + $0x34] sm:$0xf]
        %v1493 = vld [vmem:[%s1478 + $0x38] sm:$0xf]
        %v1494 = vld [vmem:[%s1478 + $0x3c] sm:$0xf]
        %v1496 = vunpack.c.l.b16 %v1477
        %v1497 = vpack.c.b16 %v1193, %v1496
        %vm1498 = vcmask 1046528
        %v1499 = vrot.slane %v1497, 1
        %v1500 = vrot.slane %v1202, 1
        %v1501 = vsel %vm1498, %v1499, %v1500
        %v1502 = vrot.slane %v1203, 1
        %v1503 = vsel %vm1498, %v1500, %v1502
        %v1504 = vrot.slane %v1204, 1
        %v1505 = vsel %vm1498, %v1502, %v1504
        %v1506 = vrot.slane %v1205, 1
        %v1507 = vsel %vm1498, %v1504, %v1506
        %v1528 = vunpack.c.l.b16 %v1479
        %v1529 = vunpack.c.l.b16 %v1480
        %v1530 = vunpack.c.l.b16 %v1481
        %v1531 = vunpack.c.l.b16 %v1482
        %v1532 = vunpack.c.l.b16 %v1483
        %v1533 = vunpack.c.l.b16 %v1484
        %v1534 = vunpack.c.l.b16 %v1485
        %v1535 = vunpack.c.l.b16 %v1486
        %v1536 = vunpack.c.l.b16 %v1487
        %v1537 = vunpack.c.l.b16 %v1488
        %v1538 = vunpack.c.l.b16 %v1489
        %v1539 = vunpack.c.l.b16 %v1490
        %v1540 = vunpack.c.l.b16 %v1491
        %v1541 = vunpack.c.l.b16 %v1492
        %v1542 = vunpack.c.l.b16 %v1493
        %v1543 = vunpack.c.l.b16 %v1494
        %v1544 = vpack.c.b16 %v1529, %v1528
        %v1545 = vpack.c.b16 %v1531, %v1530
        %v1546 = vpack.c.b16 %v1533, %v1532
        %v1547 = vpack.c.b16 %v1535, %v1534
        %v1548 = vpack.c.b16 %v1537, %v1536
        %v1549 = vpack.c.b16 %v1539, %v1538
        %v1550 = vpack.c.b16 %v1541, %v1540
        %v1551 = vpack.c.b16 %v1543, %v1542
        %1560 = vmatprep.subr.bf16.mxu0 0
        %1561 = vmatpush1.bf16.msra.mxu0 %v1544
        %1562 = vmatprep.subr.bf16.mxu0 0
        %1563 = vmatpush1.bf16.msra.mxu0 %v1545
        %1564 = vmatprep.subr.bf16.mxu0 0
        %1565 = vmatpush1.bf16.msra.mxu0 %v1546
        %1566 = vmatprep.subr.bf16.mxu0 0
        %1567 = vmatpush1.bf16.msra.mxu0 %v1547
        %1568 = vmatprep.subr.bf16.mxu0 0
        %1569 = vmatpush1.bf16.msra.mxu0 %v1548
        %1570 = vmatprep.subr.bf16.mxu0 0
        %1571 = vmatpush1.bf16.msra.mxu0 %v1549
        %1572 = vmatprep.subr.bf16.mxu0 0
        %1573 = vmatpush1.bf16.msra.mxu0 %v1550
        %1574 = vmatprep.subr.bf16.mxu0 0
        %1575 = vmatpush1.bf16.msra.mxu0 %v1551
        %1576 = vmatprep.subr.bf16.mxu0 0
        %1577 = vmatpush1.bf16.msra.mxu0 0
        %1578 = vmatprep.subr.bf16.mxu0 0
        %1579 = vmatpush1.bf16.msra.mxu0 0
        %1580 = vmatprep.subr.bf16.mxu0 0
        %1581 = vmatpush1.bf16.msra.mxu0 0
        %1582 = vmatprep.subr.bf16.mxu0 0
        %1583 = vmatpush1.bf16.msra.mxu0 0
        %1584 = vmatprep.subr.bf16.mxu0 0
        %1585 = vmatpush1.bf16.msra.mxu0 0
        %1586 = vmatprep.subr.bf16.mxu0 0
        %1587 = vmatpush1.bf16.msra.mxu0 0
        %1588 = vmatprep.subr.bf16.mxu0 0
        %1589 = vmatpush1.bf16.msra.mxu0 0
        %1590 = vmatprep.subr.bf16.mxu0 0
        %1591 = vmatpush1.bf16.msra.mxu0 0
        %1592 = vmatprep.mubr.bf16.mxu0 0
        %1593 = vmatmul.mubr.bf16.gmra.mrb[0].mxu0 %v1501
        %v1594 = vpop.f32.mrb[0].mxu0
        %v1595 = vadd.f32 0.0, %v1594
        %v1596 = vpop.f32.mrb[0].mxu0
        %v1597 = vpop.f32.mrb[0].mxu0
        %v1598 = vadd.f32 0.0, %v1597
        %v1599 = vpop.f32.mrb[0].mxu0
        %1600 = vmatprep.mubr.bf16.mxu0 0
        %1601 = vmatmul.mubr.bf16.gmra.mrb[0].mxu0 %v1503
        %v1602 = vpop.f32.mrb[0].mxu0
        %v1603 = vadd.f32 0.0, %v1602
        %v1604 = vpop.f32.mrb[0].mxu0
        %v1605 = vpop.f32.mrb[0].mxu0
        %v1606 = vadd.f32 0.0, %v1605
        %v1607 = vpop.f32.mrb[0].mxu0
        %1608 = vmatprep.mubr.bf16.mxu0 0
        %1609 = vmatmul.mubr.bf16.gmra.mrb[0].mxu0 %v1505
        %v1610 = vpop.f32.mrb[0].mxu0
        %v1611 = vadd.f32 0.0, %v1610
        %v1612 = vpop.f32.mrb[0].mxu0
        %v1613 = vpop.f32.mrb[0].mxu0
        %v1614 = vadd.f32 0.0, %v1613
        %v1615 = vpop.f32.mrb[0].mxu0
        %1616 = vmatprep.mubr.bf16.mxu0 0
        %1617 = vmatmul.mubr.bf16.gmra.mrb[0].mxu0 %v1507
        %v1618 = vpop.f32.mrb[0].mxu0
        %v1619 = vadd.f32 0.0, %v1618
        %v1620 = vpop.f32.mrb[0].mxu0
        %v1621 = vpop.f32.mrb[0].mxu0
        %v1622 = vadd.f32 0.0, %v1621
        %v1623 = vpop.f32.mrb[0].mxu0
        %1624 = vdwg.mxu0
        %v1625 = vadd.f32 %v1447, %v1595
        %v1626 = vadd.f32 %v1450, %v1598
        %v1627 = vadd.f32 %v1455, %v1603
        %v1628 = vadd.f32 %v1458, %v1606
        %v1629 = vadd.f32 %v1463, %v1611
        %v1630 = vadd.f32 %v1466, %v1614
        %v1631 = vadd.f32 %v1471, %v1619
        %v1632 = vadd.f32 %v1474, %v1622
        %v1633 = vld [vmem:[%s6] sm:$0x1]
        %v1635 = vlaneseq
        %v1636 = vshrl.u32 %v1635, 7
        %v1637 = vsub.s32 0, %v1636
        %v1638 = vrot.slane %v1633, %v1637
        %v1640 = vadd.f32 %v1625, %v1638
        %v1641 = vadd.f32 %v1626, %v1638
        %v1642 = vadd.f32 %v1627, %v1638
        %v1643 = vadd.f32 %v1628, %v1638
        %v1644 = vadd.f32 %v1629, %v1638
        %v1645 = vadd.f32 %v1630, %v1638
        %v1646 = vadd.f32 %v1631, %v1638
        %v1647 = vadd.f32 %v1632, %v1638
        %vm1648 = vcmp.ge.f32.partialorder %v1640, 0.0
        %vm1649 = vcmp.ge.f32.partialorder %v1641, 0.0
        %vm1650 = vcmp.ge.f32.partialorder %v1642, 0.0
        %vm1651 = vcmp.ge.f32.partialorder %v1643, 0.0
        %vm1652 = vcmp.ge.f32.partialorder %v1644, 0.0
        %vm1653 = vcmp.ge.f32.partialorder %v1645, 0.0
        %vm1654 = vcmp.ge.f32.partialorder %v1646, 0.0
        %vm1655 = vcmp.ge.f32.partialorder %v1647, 0.0
        %v1656 = vmul.f32 %v1640, 0.1
        %v1657 = vmul.f32 %v1641, 0.1
        %v1658 = vmul.f32 %v1642, 0.1
        %v1659 = vmul.f32 %v1643, 0.1
        %v1660 = vmul.f32 %v1644, 0.1
        %v1661 = vmul.f32 %v1645, 0.1
        %v1662 = vmul.f32 %v1646, 0.1
        %v1663 = vmul.f32 %v1647, 0.1
        %v1664 = vsel %vm1648, %v1640, %v1656
        %v1665 = vsel %vm1649, %v1641, %v1657
        %v1666 = vsel %vm1650, %v1642, %v1658
        %v1667 = vsel %vm1651, %v1643, %v1659
        %v1668 = vsel %vm1652, %v1644, %v1660
        %v1669 = vsel %vm1653, %v1645, %v1661
        %v1670 = vsel %vm1654, %v1646, %v1662
        %v1671 = vsel %vm1655, %v1647, %v1663
        %v1672 = vld [vmem:[%s380] sm:$0xff]
        %v1673 = vld [vmem:[%s380 + $0x8] sm:$0xff]
        %v1674 = vld [vmem:[%s380 + $0x10] sm:$0xff]
        %v1675 = vld [vmem:[%s380 + $0x18] sm:$0xff]
        %v1676 = vld [vmem:[%s380 + $0x20] sm:$0xff]
        %v1677 = vld [vmem:[%s380 + $0x28] sm:$0xff]
        %v1678 = vld [vmem:[%s380 + $0x30] sm:$0xff]
        %v1679 = vld [vmem:[%s380 + $0x38] sm:$0xff]
        %v1680 = vadd.f32 %v1672, %v1664
        %v1681 = vadd.f32 %v1673, %v1665
        %v1682 = vadd.f32 %v1674, %v1666
        %v1683 = vadd.f32 %v1675, %v1667
        %v1684 = vadd.f32 %v1676, %v1668
        %v1685 = vadd.f32 %v1677, %v1669
        %v1686 = vadd.f32 %v1678, %v1670
        %v1687 = vadd.f32 %v1679, %v1671
        %1688 = vst [vmem:[%s446] sm:$0xff] %v1680
        %1689 = vst [vmem:[%s446 + $0x8] sm:$0xff] %v1681
        %1690 = vst [vmem:[%s446 + $0x10] sm:$0xff] %v1682
        %1691 = vst [vmem:[%s446 + $0x18] sm:$0xff] %v1683
        %1692 = vst [vmem:[%s446 + $0x20] sm:$0xff] %v1684
        %1693 = vst [vmem:[%s446 + $0x28] sm:$0xff] %v1685
        %1694 = vst [vmem:[%s446 + $0x30] sm:$0xff] %v1686
        %1695 = vst [vmem:[%s446 + $0x38] sm:$0xff] %v1687
        %s1696 = sand.u32 %s234, 1
        %s1697 = scalar_lea.sflag [#allocation6], %s1696
        %s1698 = sand.u32 %s234, 1
        %s1699 = smul.addr %s1698, 64
        %s1700 = scalar_lea.vmem [#allocation13], %s1699
        // Predicated region
        $region93: #{tpu_custom_call.1} parent=47 // pred_check
          %p1701 = pneg %p244
        $region94: #{tpu_custom_call.1} parent=47 // pred_check_branch
          %1703 = sbr.rel (%p1701) target = $region96
        $region95: #{tpu_custom_call.1} parent=47 // pred_region
          %s1704 = smul.u32 8, %s33
          %s1706 = ssub.s32 1024, 1024
          %1707 = vsyncadd %s1697, %s1706
          %s1708 = smul.addr %s32, 32
          %s1709 = sadd.s32 %s1704, %s1708
          %s1710 = smul.addr %s1709, 128
          %s1711 = scalar_lea.hbm %s7, %s1710
          %s1712 = sshll.u32 %s1700, 4
          %s1713 = int_to_ptr.vmem [resolvable:$true] %s1712
          %1718 = dma.vmem_to_hbm [thread:$0]  %s1713, 1024, %s1711, %s1697, 128, 128, 8
        $region96: #{tpu_custom_call.1} parent=47 // pred_fallthru
          _
      $region48: #{tpu_custom_call.1} parent=5 // pred_fallthru
        _
      %p1719 = scmp.le.s32.totalorder 2, %s23
      // Predicated region
      $region97: #{tpu_custom_call.1} parent=5 // pred_check
        %p1720 = pneg %p1719
      $region98: #{tpu_custom_call.1} parent=5 // pred_check_branch
        %1722 = sbr.rel (%p1720) target = $region100
      $region99: #{tpu_custom_call.1} parent=5 // pred_region
        %s1723 = ssub.s32 %s23, 2
        // Predicated region
        $region101: #{tpu_custom_call.1} parent=99 // pred_check
          %p1724 = pneg %p250
        $region102: #{tpu_custom_call.1} parent=99 // pred_check_branch
          %1726 = sbr.rel (%p1724) target = $region104
        $region103: #{tpu_custom_call.1} parent=99 // pred_region
          %s1727 = sand.u32 %s235, 1
          %s1728 = scalar_lea.sflag [#allocation6], %s1727
          %s1729 = sand.u32 %s235, 1
          %s1730 = smul.addr %s1729, 64
          %s1731 = scalar_lea.vmem [#allocation13], %s1730
          %1732 = dma.done %s1728, 1024
        $region104: #{tpu_custom_call.1} parent=99 // pred_fallthru
          _
      $region100: #{tpu_custom_call.1} parent=5 // pred_fallthru
        _
    $region6: #{tpu_custom_call.1} parent=1 // loop_footer
      %s27 = sadd.s32 1, %s23
    $region7: #{tpu_custom_call.1} parent=1 // loop_footer_branch
      %22 = sbr.rel target = $region3
    $region8: #{tpu_custom_call.1} parent=1 // loop_exit
      _
    %1733 = vsyncpa [#allocation5], 1
    %s1734 = scalar_lea.sflag [#allocation5], 1
    %1735 = vsyncpa %s1734, 1
    %1736 = vsyncpa [#allocation8], 1
    %s1737 = scalar_lea.sflag [#allocation8], 1
    %1738 = vsyncpa %s1737, 1
    %1739 = vsyncpa [#allocation11], 1
    %1740 = vsyncpa [#allocation6], 1
    %s1741 = scalar_lea.sflag [#allocation6], 1
    %1742 = vsyncpa %s1741, 1

</llo_original>
